<compile_context>
chip_gen: v5e
topology: v5e:2x2
jax: 0.10.0
libtpu: 0.0.40
codegen_flags: <defaults>
</compile_context>

<pallas_src>
import functools

import jax
import jax.numpy as jnp
from jax.experimental import pallas as pl
from jax.experimental.pallas import tpu as pltpu

BN_EPS = 1e-5
_LANE = 128
_SUBLANE = 8
_MAX_BATCH_TILE = 256


def _round_up(x, m):
    return (x + m - 1) // m * m


def _pad2(a, r, c):
    return jnp.pad(a, ((0, r - a.shape[0]), (0, c - a.shape[1])))


def _pad_row(a, n):
    return jnp.pad(a, (0, n - a.shape[0])).reshape(1, n)


# ----------------------------------------------------------------------------
# Single fused kernel: the whole network, packed weights resident in VMEM.
# ----------------------------------------------------------------------------
def _network_kernel(x_ref, wk_in_ref, wk_inner_ref, bias_ref, o_ref, *,
                    f_in_p, f_inner_p, f_out_p):
    x = x_ref[...]                                   # (TB, f_in_p) f32
    xb = x.astype(jnp.bfloat16)

    # Static, 128-aligned lane slices of the packed bf16 weight slabs.
    w1m = wk_in_ref[:, 0:f_inner_p]                  # (f_in_p,   f_inner_p)
    w1 = wk_in_ref[:, f_inner_p:2 * f_inner_p]       # (f_in_p,   f_inner_p)  BN0 folded
    c0 = f_in_p
    c1 = c0 + f_inner_p
    w2m = wk_inner_ref[:, 0:c0]                      # (f_inner_p, f_in_p)    BNm folded
    w2 = wk_inner_ref[:, c0:c1]                      # (f_inner_p, f_inner_p)
    w3 = wk_inner_ref[:, c1:c1 + f_out_p]            # (f_inner_p, f_out_p)

    # Bias / BN slab rows (f32).
    b1m = bias_ref[0:1, 0:f_inner_p]
    b2m = bias_ref[1:2, 0:f_in_p]
    b1 = bias_ref[2:3, 0:f_inner_p]
    bn1a = bias_ref[3:4, 0:f_inner_p]
    bn1c = bias_ref[4:5, 0:f_inner_p]
    b2 = bias_ref[5:6, 0:f_inner_p]
    bn2a = bias_ref[6:7, 0:f_inner_p]
    bn2c = bias_ref[7:8, 0:f_inner_p]
    b3 = bias_ref[8:9, 0:f_out_p]

    # ---- Mask ---- (bf16 operands into the MXU, f32 accumulate + f32 VPU math)
    h = jnp.dot(xb, w1m, preferred_element_type=jnp.float32) + b1m
    h = jnp.maximum(h, 0.0)
    m = jax.nn.sigmoid(
        jnp.dot(h.astype(jnp.bfloat16), w2m, preferred_element_type=jnp.float32) + b2m)
    mx = m * x                                       # mask output * input (f32)

    # ---- trunk (dropouts = identity in eval; BN0 pre-folded into w1/b1) ----
    h1 = jnp.dot(mx.astype(jnp.bfloat16), w1, preferred_element_type=jnp.float32) + b1
    h1 = jnp.maximum(h1, 0.0) * bn1a + bn1c          # BN1 affine

    h2 = jnp.dot(h1.astype(jnp.bfloat16), w2, preferred_element_type=jnp.float32) + b2
    h2 = jnp.maximum(h2, 0.0) * bn2a + bn2c          # BN2 affine

    y = jnp.dot(h2.astype(jnp.bfloat16), w3, preferred_element_type=jnp.float32) + b3
    o_ref[...] = y.astype(o_ref.dtype)


# ----------------------------------------------------------------------------
# Parameter construction (deterministic, mirrors the PyTorch module's shapes)
# ----------------------------------------------------------------------------
def _linear_params(key, fan_in, fan_out):
    kw, kb = jax.random.split(key)
    bound = 1.0 / jnp.sqrt(fan_in)
    # stored transposed: (in, out) for x @ W
    w = jax.random.uniform(kw, (fan_in, fan_out), jnp.float32, -bound, bound)
    b = jax.random.uniform(kb, (fan_out,), jnp.float32, -bound, bound)
    return w, b


def _bn_affine(num_features):
    # fresh BatchNorm1d (eval): gamma=1, beta=0, running_mean=0, running_var=1
    a = jnp.full((num_features,), 1.0 / jnp.sqrt(1.0 + BN_EPS), jnp.float32)
    c = jnp.zeros((num_features,), jnp.float32)
    return a, c  # bn(t) = t * a + c


def _weight_norm(w_t):
    """weight_norm over a transposed weight (in, out): norm per output column.
    At nn.utils.weight_norm init g = ||v||, so W == v; the math (plus the
    recalibrate_layer NaN scrub) is still executed for semantic fidelity."""
    v = jnp.where(jnp.isnan(w_t), jnp.float32(1e-7), w_t)   # recalibrate_layer
    norm = jnp.sqrt(jnp.sum(v * v, axis=0, keepdims=True))  # (1, out)
    g = norm                                                 # init: g = ||v||
    return g * v / norm


def init_params(key, f_in, f_inner, f_out):
    ks = jax.random.split(key, 8)
    p = {}
    # Mask
    p["mask_w1"], p["mask_b1"] = _linear_params(ks[0], f_in, f_inner)
    p["mask_w2"], p["mask_b2"] = _linear_params(ks[1], f_inner, f_in)
    p["mask_bn_a"], p["mask_bn_c"] = _bn_affine(f_inner)
    # main trunk
    p["bn0_a"], p["bn0_c"] = _bn_affine(f_in)
    w, b = _linear_params(ks[2], f_in, f_inner)
    p["w1"], p["b1"] = _weight_norm(w), b
    p["bn1_a"], p["bn1_c"] = _bn_affine(f_inner)
    w, b = _linear_params(ks[3], f_inner, f_inner)
    p["w2"], p["b2"] = _weight_norm(w), b
    p["bn2_a"], p["bn2_c"] = _bn_affine(f_inner)
    w, b = _linear_params(ks[4], f_inner, f_out)
    p["w3"], p["b3"] = _weight_norm(w), b
    return p


def prepare_params(p):
    """Pre-fold BN layers into adjacent matmuls, pad to MXU-aligned shapes and pack
    everything into 3 slabs (2 bf16 weight slabs grouped by K + 1 small f32 bias slab)
    ONCE, outside the per-forward (jitted) path."""
    f_in = p["mask_w1"].shape[0]
    f_inner = p["mask_w1"].shape[1]
    f_out = p["w3"].shape[1]

    f_in_p = _round_up(f_in, _LANE)
    f_inner_p = _round_up(f_inner, _LANE)
    f_out_p = _round_up(f_out, _LANE)
    w_max = max(f_in_p, f_inner_p, f_out_p)

    # Fold BNm (between the two Mask linears) into W2m / b2m (exact, in f32).
    w2m = p["mask_w2"] * p["mask_bn_a"][:, None]
    b2m = p["mask_b2"] + p["mask_bn_c"] @ p["mask_w2"]
    # Fold BN0 (before fcl_input's matmul) into W1 / b1 (exact, in f32).
    w1 = p["w1"] * p["bn0_a"][:, None]
    b1 = p["b1"] + p["bn0_c"] @ p["w1"]

    # Weight slabs, grouped by contraction dim K, stored bf16 (halves weight DMA).
    #   K = f_in_p   : [ w1m | w1 ]        -> (f_in_p,    2*f_inner_p)
    #   K = f_inner_p: [ w2m | w2 | w3 ]   -> (f_inner_p, f_in_p + f_inner_p + f_out_p)
    wk_in = jnp.concatenate(
        [_pad2(p["mask_w1"], f_in_p, f_inner_p),
         _pad2(w1, f_in_p, f_inner_p)], axis=1).astype(jnp.bfloat16)
    wk_inner = jnp.concatenate(
        [_pad2(w2m, f_inner_p, f_in_p),
         _pad2(p["w2"], f_inner_p, f_inner_p),
         _pad2(p["w3"], f_inner_p, f_out_p)], axis=1).astype(jnp.bfloat16)

    # All 9 (1, N) bias / BN vectors packed into one small f32 slab (rows 0..8).
    rows = [
        _pad_row(p["mask_b1"], w_max),   # 0: b1m
        _pad_row(b2m, w_max),            # 1: b2m (BNm folded)
        _pad_row(b1, w_max),             # 2: b1  (BN0 folded)
        _pad_row(p["bn1_a"], w_max),     # 3
        _pad_row(p["bn1_c"], w_max),     # 4
        _pad_row(p["b2"], w_max),        # 5
        _pad_row(p["bn2_a"], w_max),     # 6
        _pad_row(p["bn2_c"], w_max),     # 7
        _pad_row(p["b3"], w_max),        # 8
    ]
    bias = jnp.concatenate(
        rows + [jnp.zeros((16 - len(rows), w_max), jnp.float32)], axis=0)

    prepped = tuple(jax.device_put(a) for a in (wk_in, wk_inner, bias))
    dims = (f_in, f_inner, f_out, f_in_p, f_inner_p, f_out_p)
    return prepped, dims


# ----------------------------------------------------------------------------
# Forward pass: one pallas_call for the whole network, batch-tiled grid with
# grid-invariant (VMEM-resident) weight slabs.
# ----------------------------------------------------------------------------
@functools.partial(jax.jit, static_argnums=(2,))
def three_layers_forward(prepped, x, dims):
    f_in, f_inner, f_out, f_in_p, f_inner_p, f_out_p = dims
    wk_in, wk_inner, bias = prepped
    B = x.shape[0]

    tb = min(_round_up(B, _SUBLANE), _MAX_BATCH_TILE)     # batch tile (fills MXU M rows)
    bp = _round_up(B, tb)
    n_b = bp // tb
    xp = _pad2(x, bp, f_in_p)

    kernel = functools.partial(_network_kernel, f_in_p=f_in_p,
                               f_inner_p=f_inner_p, f_out_p=f_out_p)

    out = pl.pallas_call(
        kernel,
        out_shape=jax.ShapeDtypeStruct((bp, f_out_p), x.dtype),
        grid=(n_b,),
        in_specs=[
            pl.BlockSpec((tb, f_in_p), lambda i: (i, 0)),        # activations: tiled over batch
            pl.BlockSpec(wk_in.shape, lambda i: (0, 0)),         # weights: grid-invariant
            pl.BlockSpec(wk_inner.shape, lambda i: (0, 0)),      #   (stay VMEM-resident)
            pl.BlockSpec(bias.shape, lambda i: (0, 0)),
        ],
        out_specs=pl.BlockSpec((tb, f_out_p), lambda i: (i, 0)),
        compiler_params=pltpu.CompilerParams(
            dimension_semantics=("parallel",),                   # megacore over batch tiles
            vmem_limit_bytes=32 << 20,
        ),
    )(xp, wk_in, wk_inner, bias)

    return out[:B, :f_out]


# ----------------------------------------------------------------------------
def _reference_forward(p, x):
    """Pure-jnp f32 reference of the same eval-mode forward, for verification."""
    def bn(t, a, c):
        return t * a + c

    h = jnp.maximum(x @ p["mask_w1"] + p["mask_b1"], 0.0)
    m = jax.nn.sigmoid(bn(h, p["mask_bn_a"], p["mask_bn_c"]) @ p["mask_w2"]
                       + p["mask_b2"])
    x1 = bn(m * x, p["bn0_a"], p["bn0_c"])
    h1 = bn(jnp.maximum(x1 @ p["w1"] + p["b1"], 0.0), p["bn1_a"], p["bn1_c"])
    h2 = bn(jnp.maximum(h1 @ p["w2"] + p["b2"], 0.0), p["bn2_a"], p["bn2_c"])
    return h2 @ p["w3"] + p["b3"]


if __name__ == "__main__":
    # small shapes consistent with the module (Linear/BatchNorm1d on [B, F])
    batch = 8
    num_input_features = 256
    num_inner_features = 512
    num_output_features = 206   # non-multiple of 128; padded to 256, sliced outside

    key = jax.random.PRNGKey(0)
    k_param, k_x = jax.random.split(key)
    params = init_params(k_param, num_input_features, num_inner_features,
                         num_output_features)
    prepped, dims = prepare_params(params)
    x = jax.random.normal(k_x, (batch, num_input_features), jnp.float32)

    y = three_layers_forward(prepped, x, dims)
    y = jax.block_until_ready(y)

    y_ref = _reference_forward(params, x)
    assert y.shape == (batch, num_output_features)
    # Tolerance relaxed vs the f32 reference because weights / MXU operands are bf16.
    assert jnp.allclose(y, y_ref, atol=2e-2, rtol=2e-2), "mismatch vs reference"

    print("KERNEL_OK")
</pallas_src>

<mosaic_0001>
module attributes {stable_mosaic.version = 11 : i64} {
  func.func @_network_kernel(%arg0: i32, %arg1: memref<8x256xf32, #tpu.memory_space<vmem>>, %arg2: memref<256x1024xbf16, #tpu.memory_space<vmem>>, %arg3: memref<512x1024xbf16, #tpu.memory_space<vmem>>, %arg4: memref<16x512xf32, #tpu.memory_space<vmem>>, %arg5: memref<8x256xf32, #tpu.memory_space<vmem>>) attributes {dimension_semantics = [#tpu.dimension_semantics<parallel>], iteration_bounds = array<i64: 1>, scalar_prefetch = 0 : i64, scratch_operands = 0 : i64, tpu.core_type = #tpu.core_type<tc>, window_params = [{transform_indices = @transform_0, window_bounds = array<i64: 8, 256>}, {pipeline_mode = #tpu.pipeline_mode<synchronous>, transform_indices = @transform_1, window_bounds = array<i64: 256, 1024>}, {pipeline_mode = #tpu.pipeline_mode<synchronous>, transform_indices = @transform_2, window_bounds = array<i64: 512, 1024>}, {pipeline_mode = #tpu.pipeline_mode<synchronous>, transform_indices = @transform_3, window_bounds = array<i64: 16, 512>}, {transform_indices = @transform_4, window_bounds = array<i64: 8, 256>}]} {
    %c0 = arith.constant 0 : index
    %c0_0 = arith.constant 0 : index
    %0 = vector.load %arg1[%c0, %c0_0] : memref<8x256xf32, #tpu.memory_space<vmem>>, vector<8x256xf32>
    %1 = arith.truncf %0 : vector<8x256xf32> to vector<8x256xbf16>
    %c0_1 = arith.constant 0 : index
    %c0_2 = arith.constant 0 : index
    %2 = vector.load %arg2[%c0_1, %c0_2] : memref<256x1024xbf16, #tpu.memory_space<vmem>>, vector<256x512xbf16>
    %c0_3 = arith.constant 0 : index
    %c512 = arith.constant 512 : index
    %3 = vector.load %arg2[%c0_3, %c512] : memref<256x1024xbf16, #tpu.memory_space<vmem>>, vector<256x512xbf16>
    %c0_4 = arith.constant 0 : index
    %c0_5 = arith.constant 0 : index
    %4 = vector.load %arg3[%c0_4, %c0_5] : memref<512x1024xbf16, #tpu.memory_space<vmem>>, vector<512x256xbf16>
    %c0_6 = arith.constant 0 : index
    %c256 = arith.constant 256 : index
    %5 = vector.load %arg3[%c0_6, %c256] : memref<512x1024xbf16, #tpu.memory_space<vmem>>, vector<512x512xbf16>
    %c0_7 = arith.constant 0 : index
    %c768 = arith.constant 768 : index
    %6 = vector.load %arg3[%c0_7, %c768] : memref<512x1024xbf16, #tpu.memory_space<vmem>>, vector<512x256xbf16>
    %c0_8 = arith.constant 0 : index
    %c0_9 = arith.constant 0 : index
    %7 = vector.load %arg4[%c0_8, %c0_9] : memref<16x512xf32, #tpu.memory_space<vmem>>, vector<1x512xf32>
    %c1 = arith.constant 1 : index
    %c0_10 = arith.constant 0 : index
    %8 = vector.load %arg4[%c1, %c0_10] : memref<16x512xf32, #tpu.memory_space<vmem>>, vector<1x256xf32>
    %c2 = arith.constant 2 : index
    %c0_11 = arith.constant 0 : index
    %9 = vector.load %arg4[%c2, %c0_11] : memref<16x512xf32, #tpu.memory_space<vmem>>, vector<1x512xf32>
    %c3 = arith.constant 3 : index
    %c0_12 = arith.constant 0 : index
    %10 = vector.load %arg4[%c3, %c0_12] : memref<16x512xf32, #tpu.memory_space<vmem>>, vector<1x512xf32>
    %c4 = arith.constant 4 : index
    %c0_13 = arith.constant 0 : index
    %11 = vector.load %arg4[%c4, %c0_13] : memref<16x512xf32, #tpu.memory_space<vmem>>, vector<1x512xf32>
    %c5 = arith.constant 5 : index
    %c0_14 = arith.constant 0 : index
    %12 = vector.load %arg4[%c5, %c0_14] : memref<16x512xf32, #tpu.memory_space<vmem>>, vector<1x512xf32>
    %c6 = arith.constant 6 : index
    %c0_15 = arith.constant 0 : index
    %13 = vector.load %arg4[%c6, %c0_15] : memref<16x512xf32, #tpu.memory_space<vmem>>, vector<1x512xf32>
    %c7 = arith.constant 7 : index
    %c0_16 = arith.constant 0 : index
    %14 = vector.load %arg4[%c7, %c0_16] : memref<16x512xf32, #tpu.memory_space<vmem>>, vector<1x512xf32>
    %c8 = arith.constant 8 : index
    %c0_17 = arith.constant 0 : index
    %15 = vector.load %arg4[%c8, %c0_17] : memref<16x512xf32, #tpu.memory_space<vmem>>, vector<1x256xf32>
    %cst = arith.constant dense<0.000000e+00> : vector<8x512xf32>
    %16 = tpu.matmul %1, %2, %cst {dimension_numbers = #tpu.dot_dimension_numbers<[1], [0], [0], [1], [0, 0, 1, 1], [], []>} : vector<8x256xbf16>, vector<256x512xbf16>, vector<8x512xf32> -> vector<8x512xf32>
    %17 = vector.broadcast %7 : vector<1x512xf32> to vector<8x512xf32>
    %18 = arith.addf %16, %17 : vector<8x512xf32>
    %cst_18 = arith.constant 0.000000e+00 : f32
    %19 = vector.broadcast %cst_18 : f32 to vector<8x512xf32>
    %20 = arith.maximumf %18, %19 : vector<8x512xf32>
    %21 = arith.truncf %20 : vector<8x512xf32> to vector<8x512xbf16>
    %cst_19 = arith.constant dense<0.000000e+00> : vector<8x256xf32>
    %22 = tpu.matmul %21, %4, %cst_19 {dimension_numbers = #tpu.dot_dimension_numbers<[1], [0], [0], [1], [0, 0, 1, 1], [], []>} : vector<8x512xbf16>, vector<512x256xbf16>, vector<8x256xf32> -> vector<8x256xf32>
    %23 = vector.broadcast %8 : vector<1x256xf32> to vector<8x256xf32>
    %24 = arith.addf %22, %23 : vector<8x256xf32>
    %25 = arith.negf %24 : vector<8x256xf32>
    %26 = math.exp %25 : vector<8x256xf32>
    %cst_20 = arith.constant 1.000000e+00 : f32
    %27 = vector.broadcast %cst_20 : f32 to vector<8x256xf32>
    %28 = arith.addf %27, %26 : vector<8x256xf32>
    %29 = arith.divf %27, %28 : vector<8x256xf32>
    %30 = arith.mulf %29, %0 : vector<8x256xf32>
    %31 = arith.truncf %30 : vector<8x256xf32> to vector<8x256xbf16>
    %cst_21 = arith.constant dense<0.000000e+00> : vector<8x512xf32>
    %32 = tpu.matmul %31, %3, %cst_21 {dimension_numbers = #tpu.dot_dimension_numbers<[1], [0], [0], [1], [0, 0, 1, 1], [], []>} : vector<8x256xbf16>, vector<256x512xbf16>, vector<8x512xf32> -> vector<8x512xf32>
    %33 = vector.broadcast %9 : vector<1x512xf32> to vector<8x512xf32>
    %34 = arith.addf %32, %33 : vector<8x512xf32>
    %cst_22 = arith.constant 0.000000e+00 : f32
    %35 = vector.broadcast %cst_22 : f32 to vector<8x512xf32>
    %36 = arith.maximumf %34, %35 : vector<8x512xf32>
    %37 = vector.broadcast %10 : vector<1x512xf32> to vector<8x512xf32>
    %38 = arith.mulf %36, %37 : vector<8x512xf32>
    %39 = vector.broadcast %11 : vector<1x512xf32> to vector<8x512xf32>
    %40 = arith.addf %38, %39 : vector<8x512xf32>
    %41 = arith.truncf %40 : vector<8x512xf32> to vector<8x512xbf16>
    %cst_23 = arith.constant dense<0.000000e+00> : vector<8x512xf32>
    %42 = tpu.matmul %41, %5, %cst_23 {dimension_numbers = #tpu.dot_dimension_numbers<[1], [0], [0], [1], [0, 0, 1, 1], [], []>} : vector<8x512xbf16>, vector<512x512xbf16>, vector<8x512xf32> -> vector<8x512xf32>
    %43 = vector.broadcast %12 : vector<1x512xf32> to vector<8x512xf32>
    %44 = arith.addf %42, %43 : vector<8x512xf32>
    %cst_24 = arith.constant 0.000000e+00 : f32
    %45 = vector.broadcast %cst_24 : f32 to vector<8x512xf32>
    %46 = arith.maximumf %44, %45 : vector<8x512xf32>
    %47 = vector.broadcast %13 : vector<1x512xf32> to vector<8x512xf32>
    %48 = arith.mulf %46, %47 : vector<8x512xf32>
    %49 = vector.broadcast %14 : vector<1x512xf32> to vector<8x512xf32>
    %50 = arith.addf %48, %49 : vector<8x512xf32>
    %51 = arith.truncf %50 : vector<8x512xf32> to vector<8x512xbf16>
    %cst_25 = arith.constant dense<0.000000e+00> : vector<8x256xf32>
    %52 = tpu.matmul %51, %6, %cst_25 {dimension_numbers = #tpu.dot_dimension_numbers<[1], [0], [0], [1], [0, 0, 1, 1], [], []>} : vector<8x512xbf16>, vector<512x256xbf16>, vector<8x256xf32> -> vector<8x256xf32>
    %53 = vector.broadcast %15 : vector<1x256xf32> to vector<8x256xf32>
    %54 = arith.addf %52, %53 : vector<8x256xf32>
    %c0_26 = arith.constant 0 : index
    %c0_27 = arith.constant 0 : index
    %55 = vector.load %arg5[%c0_26, %c0_27] : memref<8x256xf32, #tpu.memory_space<vmem>>, vector<8x256xf32>
    tpu.vector_store %arg5[%c0_26, %c0_27], %54 {strides = array<i32>} : memref<8x256xf32, #tpu.memory_space<vmem>>, vector<8x256xf32>,
    return
  }
  func.func @transform_0(%arg0: i32) -> (i32, i32) {
    %c0_i32 = arith.constant 0 : i32
    %c0_i32_0 = arith.constant 0 : i32
    return %arg0, %c0_i32 : i32, i32
  }
  func.func @transform_1(%arg0: i32) -> (i32, i32) {
    %c0_i32 = arith.constant 0 : i32
    %c0_i32_0 = arith.constant 0 : i32
    %c0_i32_1 = arith.constant 0 : i32
    return %c0_i32, %c0_i32_0 : i32, i32
  }
  func.func @transform_2(%arg0: i32) -> (i32, i32) {
    %c0_i32 = arith.constant 0 : i32
    %c0_i32_0 = arith.constant 0 : i32
    %c0_i32_1 = arith.constant 0 : i32
    return %c0_i32, %c0_i32_0 : i32, i32
  }
  func.func @transform_3(%arg0: i32) -> (i32, i32) {
    %c0_i32 = arith.constant 0 : i32
    %c0_i32_0 = arith.constant 0 : i32
    %c0_i32_1 = arith.constant 0 : i32
    return %c0_i32, %c0_i32_0 : i32, i32
  }
  func.func @transform_4(%arg0: i32) -> (i32, i32) {
    %c0_i32 = arith.constant 0 : i32
    %c0_i32_0 = arith.constant 0 : i32
    return %arg0, %c0_i32 : i32, i32
  }
}

</mosaic_0001>

<llo_original>
// kernel: three_layers_forward.1
$region0: #{three_layers_forward.1}
  #allocation0 [shape = 'u32[]', space=smem, size = 0x4, offset = 0x4, fixed_abs, tag = 'smem constant byte address 0x4 - core index']
  #allocation1 [shape = 'u32[72,128]{1,0:T(1,128)}', space=vmem, size = 0x9000, scoped, tag = 'internal scratch']
  %s0 = inlined_call_operand.hbm [shape: f32[8,256], index: 0, kind: input, shape index: {}]
  %s1 = inlined_call_operand.hbm [shape: bf16[256,1024], index: 1, kind: input, shape index: {}]
  %s2 = inlined_call_operand.hbm [shape: bf16[512,1024], index: 2, kind: input, shape index: {}]
  %s3 = inlined_call_operand.hbm [shape: f32[16,512], index: 3, kind: input, shape index: {}]
  %s4 = inlined_call_operand.hbm [shape: f32[8,256], index: 4, kind: output, shape index: {}]
  %s5 = sld [smem:[#allocation0]]
  $region42: #{three_layers_forward.1} parent=0
    _
  %s7 = ssub.s32 1, %s5
  %s8 = scalar_select 0, %s7, %s5
  $region1: #{three_layers_forward.1} parent=0
    #allocation2 [shape = 'u8[8192]{0}', space=vmem, size = 0x2000, scoped, tag = 'input window, operand 0, single buffered']
    #allocation3 [shape = 's32[1]{0}', space=sflag, size = 0x4, scoped, tag = 'scoped memory for three_layers_forward.1']
    #allocation4 [shape = 's32[1]{0}', space=sflag, size = 0x4, scoped, tag = 'scoped memory for three_layers_forward.1']
    #allocation5 [shape = 'u8[524288]{0}', space=vmem, size = 0x80000, scoped, tag = 'input window, operand 1, single buffered']
    #allocation6 [shape = 's32[1]{0}', space=sflag, size = 0x4, scoped, tag = 'scoped memory for three_layers_forward.1']
    #allocation7 [shape = 'u8[1048576]{0}', space=vmem, size = 0x100000, scoped, tag = 'input window, operand 2, single buffered']
    #allocation8 [shape = 'u8[32768]{0}', space=vmem, size = 0x8000, scoped, tag = 'input window, operand 3, single buffered']
    #allocation9 [shape = 's32[1]{0}', space=sflag, size = 0x4, scoped, tag = 'scoped memory for three_layers_forward.1']
    #allocation10 [shape = 'u8[8192]{0}', space=vmem, size = 0x2000, scoped, tag = 'output window, operand 0, single buffered']
    %9 = vsyncpa [#allocation3], 0
    %10 = vsyncpa [#allocation6], 0
    %11 = vsyncpa [#allocation9], 0
    %12 = vsyncpa [#allocation4], 0
    // Predicated region
    $region2: #{three_layers_forward.1} parent=1 // pred_check
      _
    $region3: #{three_layers_forward.1} parent=1 // pred_check_branch
      %14 = sbr.rel (0) target = $region5
    $region4: #{three_layers_forward.1} parent=1 // pred_region
      %16 = vsyncadd [#allocation3], 0
      %s18 = sshll.u32 %s0, 4
      %s19 = int_to_ptr.hbm [resolvable:$true] %s18
      %s20 = sshll.u32 [#allocation2], 4
      %s21 = int_to_ptr.vmem [resolvable:$true] %s20
      %23 = dma.hbm_to_vmem [thread:$0]  %s19, 256, %s21, [#allocation3]
    $region5: #{three_layers_forward.1} parent=1 // pred_fallthru
      _
    // Predicated region
    $region6: #{three_layers_forward.1} parent=1 // pred_check
      _
    $region7: #{three_layers_forward.1} parent=1 // pred_check_branch
      %25 = sbr.rel (0) target = $region9
    $region8: #{three_layers_forward.1} parent=1 // pred_region
      %27 = vsyncadd [#allocation6], 0
      %s28 = sshll.u32 %s1, 4
      %s29 = int_to_ptr.hbm [resolvable:$true] %s28
      %s30 = sshll.u32 [#allocation5], 4
      %s31 = int_to_ptr.vmem [resolvable:$true] %s30
      %36 = dma.hbm_to_vmem [thread:$0]  %s29, 16384, %s31, [#allocation6], 512, 512, 32
    $region9: #{three_layers_forward.1} parent=1 // pred_fallthru
      _
    // Predicated region
    $region10: #{three_layers_forward.1} parent=1 // pred_check
      _
    $region11: #{three_layers_forward.1} parent=1 // pred_check_branch
      %38 = sbr.rel (0) target = $region13
    $region12: #{three_layers_forward.1} parent=1 // pred_region
      %40 = vsyncadd [#allocation6], 0
      %s41 = sshll.u32 %s2, 4
      %s42 = int_to_ptr.hbm [resolvable:$true] %s41
      %s43 = sshll.u32 [#allocation7], 4
      %s44 = int_to_ptr.vmem [resolvable:$true] %s43
      %49 = dma.hbm_to_vmem [thread:$0]  %s42, 32768, %s44, [#allocation6], 512, 512, 32
    $region13: #{three_layers_forward.1} parent=1 // pred_fallthru
      _
    // Predicated region
    $region14: #{three_layers_forward.1} parent=1 // pred_check
      _
    $region15: #{three_layers_forward.1} parent=1 // pred_check_branch
      %51 = sbr.rel (0) target = $region17
    $region16: #{three_layers_forward.1} parent=1 // pred_region
      %53 = vsyncadd [#allocation9], 0
      %s54 = sshll.u32 %s3, 4
      %s55 = int_to_ptr.hbm [resolvable:$true] %s54
      %s56 = sshll.u32 [#allocation8], 4
      %s57 = int_to_ptr.vmem [resolvable:$true] %s56
      %62 = dma.hbm_to_vmem [thread:$0]  %s55, 1024, %s57, [#allocation9], 512, 512, 32
    $region17: #{three_layers_forward.1} parent=1 // pred_fallthru
      _
    // Predicated region
    $region18: #{three_layers_forward.1} parent=1 // pred_check
      _
    $region19: #{three_layers_forward.1} parent=1 // pred_check_branch
      %64 = sbr.rel (0) target = $region21
    $region20: #{three_layers_forward.1} parent=1 // pred_region
      %66 = dma.done [#allocation3], 256
    $region21: #{three_layers_forward.1} parent=1 // pred_fallthru
      _
    // Predicated region
    $region22: #{three_layers_forward.1} parent=1 // pred_check
      _
    $region23: #{three_layers_forward.1} parent=1 // pred_check_branch
      %68 = sbr.rel (0) target = $region25
    $region24: #{three_layers_forward.1} parent=1 // pred_region
      %70 = dma.done [#allocation6], 16384
    $region25: #{three_layers_forward.1} parent=1 // pred_fallthru
      _
    // Predicated region
    $region26: #{three_layers_forward.1} parent=1 // pred_check
      _
    $region27: #{three_layers_forward.1} parent=1 // pred_check_branch
      %72 = sbr.rel (0) target = $region29
    $region28: #{three_layers_forward.1} parent=1 // pred_region
      %74 = dma.done [#allocation6], 32768
    $region29: #{three_layers_forward.1} parent=1 // pred_fallthru
      _
    // Predicated region
    $region30: #{three_layers_forward.1} parent=1 // pred_check
      _
    $region31: #{three_layers_forward.1} parent=1 // pred_check_branch
      %76 = sbr.rel (0) target = $region33
    $region32: #{three_layers_forward.1} parent=1 // pred_region
      %78 = dma.done [#allocation9], 1024
    $region33: #{three_layers_forward.1} parent=1 // pred_fallthru
      _
    %v79 = vld [vmem:[#allocation2] sm:$0xff]
    %v80 = vld [vmem:[#allocation2 + $0x8] sm:$0xff]
    %v81 = vpack.c.bf16 %v79, %v79
    %v82 = vpack.c.bf16 %v80, %v80
    %v83 = vld [vmem:[#allocation5] sm:$0xff]
    %v84 = vld [vmem:[#allocation5 + $0x8] sm:$0xff]
    %v85 = vld [vmem:[#allocation5 + $0x20] sm:$0xff]
    %v86 = vld [vmem:[#allocation5 + $0x28] sm:$0xff]
    %v87 = vld [vmem:[#allocation5 + $0x40] sm:$0xff]
    %v88 = vld [vmem:[#allocation5 + $0x48] sm:$0xff]
    %v89 = vld [vmem:[#allocation5 + $0x60] sm:$0xff]
    %v90 = vld [vmem:[#allocation5 + $0x68] sm:$0xff]
    %v91 = vld [vmem:[#allocation5 + $0x80] sm:$0xff]
    %v92 = vld [vmem:[#allocation5 + $0x88] sm:$0xff]
    %v93 = vld [vmem:[#allocation5 + $0xa0] sm:$0xff]
    %v94 = vld [vmem:[#allocation5 + $0xa8] sm:$0xff]
    %v95 = vld [vmem:[#allocation5 + $0xc0] sm:$0xff]
    %v96 = vld [vmem:[#allocation5 + $0xc8] sm:$0xff]
    %v97 = vld [vmem:[#allocation5 + $0xe0] sm:$0xff]
    %v98 = vld [vmem:[#allocation5 + $0xe8] sm:$0xff]
    %v99 = vld [vmem:[#allocation5 + $0x100] sm:$0xff]
    %v100 = vld [vmem:[#allocation5 + $0x108] sm:$0xff]
    %v101 = vld [vmem:[#allocation5 + $0x120] sm:$0xff]
    %v102 = vld [vmem:[#allocation5 + $0x128] sm:$0xff]
    %v103 = vld [vmem:[#allocation5 + $0x140] sm:$0xff]
    %v104 = vld [vmem:[#allocation5 + $0x148] sm:$0xff]
    %v105 = vld [vmem:[#allocation5 + $0x160] sm:$0xff]
    %v106 = vld [vmem:[#allocation5 + $0x168] sm:$0xff]
    %v107 = vld [vmem:[#allocation5 + $0x180] sm:$0xff]
    %v108 = vld [vmem:[#allocation5 + $0x188] sm:$0xff]
    %v109 = vld [vmem:[#allocation5 + $0x1a0] sm:$0xff]
    %v110 = vld [vmem:[#allocation5 + $0x1a8] sm:$0xff]
    %v111 = vld [vmem:[#allocation5 + $0x1c0] sm:$0xff]
    %v112 = vld [vmem:[#allocation5 + $0x1c8] sm:$0xff]
    %v113 = vld [vmem:[#allocation5 + $0x1e0] sm:$0xff]
    %v114 = vld [vmem:[#allocation5 + $0x1e8] sm:$0xff]
    %v115 = vld [vmem:[#allocation5 + $0x200] sm:$0xff]
    %v116 = vld [vmem:[#allocation5 + $0x208] sm:$0xff]
    %v117 = vld [vmem:[#allocation5 + $0x220] sm:$0xff]
    %v118 = vld [vmem:[#allocation5 + $0x228] sm:$0xff]
    %v119 = vld [vmem:[#allocation5 + $0x240] sm:$0xff]
    %v120 = vld [vmem:[#allocation5 + $0x248] sm:$0xff]
    %v121 = vld [vmem:[#allocation5 + $0x260] sm:$0xff]
    %v122 = vld [vmem:[#allocation5 + $0x268] sm:$0xff]
    %v123 = vld [vmem:[#allocation5 + $0x280] sm:$0xff]
    %v124 = vld [vmem:[#allocation5 + $0x288] sm:$0xff]
    %v125 = vld [vmem:[#allocation5 + $0x2a0] sm:$0xff]
    %v126 = vld [vmem:[#allocation5 + $0x2a8] sm:$0xff]
    %v127 = vld [vmem:[#allocation5 + $0x2c0] sm:$0xff]
    %v128 = vld [vmem:[#allocation5 + $0x2c8] sm:$0xff]
    %v129 = vld [vmem:[#allocation5 + $0x2e0] sm:$0xff]
    %v130 = vld [vmem:[#allocation5 + $0x2e8] sm:$0xff]
    %v131 = vld [vmem:[#allocation5 + $0x300] sm:$0xff]
    %v132 = vld [vmem:[#allocation5 + $0x308] sm:$0xff]
    %v133 = vld [vmem:[#allocation5 + $0x320] sm:$0xff]
    %v134 = vld [vmem:[#allocation5 + $0x328] sm:$0xff]
    %v135 = vld [vmem:[#allocation5 + $0x340] sm:$0xff]
    %v136 = vld [vmem:[#allocation5 + $0x348] sm:$0xff]
    %v137 = vld [vmem:[#allocation5 + $0x360] sm:$0xff]
    %v138 = vld [vmem:[#allocation5 + $0x368] sm:$0xff]
    %v139 = vld [vmem:[#allocation5 + $0x380] sm:$0xff]
    %v140 = vld [vmem:[#allocation5 + $0x388] sm:$0xff]
    %v141 = vld [vmem:[#allocation5 + $0x3a0] sm:$0xff]
    %v142 = vld [vmem:[#allocation5 + $0x3a8] sm:$0xff]
    %v143 = vld [vmem:[#allocation5 + $0x3c0] sm:$0xff]
    %v144 = vld [vmem:[#allocation5 + $0x3c8] sm:$0xff]
    %v145 = vld [vmem:[#allocation5 + $0x3e0] sm:$0xff]
    %v146 = vld [vmem:[#allocation5 + $0x3e8] sm:$0xff]
    %v147 = vld [vmem:[#allocation5 + $0x10] sm:$0xff]
    %v148 = vld [vmem:[#allocation5 + $0x18] sm:$0xff]
    %v149 = vld [vmem:[#allocation5 + $0x30] sm:$0xff]
    %v150 = vld [vmem:[#allocation5 + $0x38] sm:$0xff]
    %v151 = vld [vmem:[#allocation5 + $0x50] sm:$0xff]
    %v152 = vld [vmem:[#allocation5 + $0x58] sm:$0xff]
    %v153 = vld [vmem:[#allocation5 + $0x70] sm:$0xff]
    %v154 = vld [vmem:[#allocation5 + $0x78] sm:$0xff]
    %v155 = vld [vmem:[#allocation5 + $0x90] sm:$0xff]
    %v156 = vld [vmem:[#allocation5 + $0x98] sm:$0xff]
    %v157 = vld [vmem:[#allocation5 + $0xb0] sm:$0xff]
    %v158 = vld [vmem:[#allocation5 + $0xb8] sm:$0xff]
    %v159 = vld [vmem:[#allocation5 + $0xd0] sm:$0xff]
    %v160 = vld [vmem:[#allocation5 + $0xd8] sm:$0xff]
    %v161 = vld [vmem:[#allocation5 + $0xf0] sm:$0xff]
    %v162 = vld [vmem:[#allocation5 + $0xf8] sm:$0xff]
    %v163 = vld [vmem:[#allocation5 + $0x110] sm:$0xff]
    %v164 = vld [vmem:[#allocation5 + $0x118] sm:$0xff]
    %v165 = vld [vmem:[#allocation5 + $0x130] sm:$0xff]
    %v166 = vld [vmem:[#allocation5 + $0x138] sm:$0xff]
    %v167 = vld [vmem:[#allocation5 + $0x150] sm:$0xff]
    %v168 = vld [vmem:[#allocation5 + $0x158] sm:$0xff]
    %v169 = vld [vmem:[#allocation5 + $0x170] sm:$0xff]
    %v170 = vld [vmem:[#allocation5 + $0x178] sm:$0xff]
    %v171 = vld [vmem:[#allocation5 + $0x190] sm:$0xff]
    %v172 = vld [vmem:[#allocation5 + $0x198] sm:$0xff]
    %v173 = vld [vmem:[#allocation5 + $0x1b0] sm:$0xff]
    %v174 = vld [vmem:[#allocation5 + $0x1b8] sm:$0xff]
    %v175 = vld [vmem:[#allocation5 + $0x1d0] sm:$0xff]
    %v176 = vld [vmem:[#allocation5 + $0x1d8] sm:$0xff]
    %v177 = vld [vmem:[#allocation5 + $0x1f0] sm:$0xff]
    %v178 = vld [vmem:[#allocation5 + $0x1f8] sm:$0xff]
    %v179 = vld [vmem:[#allocation5 + $0x210] sm:$0xff]
    %v180 = vld [vmem:[#allocation5 + $0x218] sm:$0xff]
    %v181 = vld [vmem:[#allocation5 + $0x230] sm:$0xff]
    %v182 = vld [vmem:[#allocation5 + $0x238] sm:$0xff]
    %v183 = vld [vmem:[#allocation5 + $0x250] sm:$0xff]
    %v184 = vld [vmem:[#allocation5 + $0x258] sm:$0xff]
    %v185 = vld [vmem:[#allocation5 + $0x270] sm:$0xff]
    %v186 = vld [vmem:[#allocation5 + $0x278] sm:$0xff]
    %v187 = vld [vmem:[#allocation5 + $0x290] sm:$0xff]
    %v188 = vld [vmem:[#allocation5 + $0x298] sm:$0xff]
    %v189 = vld [vmem:[#allocation5 + $0x2b0] sm:$0xff]
    %v190 = vld [vmem:[#allocation5 + $0x2b8] sm:$0xff]
    %v191 = vld [vmem:[#allocation5 + $0x2d0] sm:$0xff]
    %v192 = vld [vmem:[#allocation5 + $0x2d8] sm:$0xff]
    %v193 = vld [vmem:[#allocation5 + $0x2f0] sm:$0xff]
    %v194 = vld [vmem:[#allocation5 + $0x2f8] sm:$0xff]
    %v195 = vld [vmem:[#allocation5 + $0x310] sm:$0xff]
    %v196 = vld [vmem:[#allocation5 + $0x318] sm:$0xff]
    %v197 = vld [vmem:[#allocation5 + $0x330] sm:$0xff]
    %v198 = vld [vmem:[#allocation5 + $0x338] sm:$0xff]
    %v199 = vld [vmem:[#allocation5 + $0x350] sm:$0xff]
    %v200 = vld [vmem:[#allocation5 + $0x358] sm:$0xff]
    %v201 = vld [vmem:[#allocation5 + $0x370] sm:$0xff]
    %v202 = vld [vmem:[#allocation5 + $0x378] sm:$0xff]
    %v203 = vld [vmem:[#allocation5 + $0x390] sm:$0xff]
    %v204 = vld [vmem:[#allocation5 + $0x398] sm:$0xff]
    %v205 = vld [vmem:[#allocation5 + $0x3b0] sm:$0xff]
    %v206 = vld [vmem:[#allocation5 + $0x3b8] sm:$0xff]
    %v207 = vld [vmem:[#allocation5 + $0x3d0] sm:$0xff]
    %v208 = vld [vmem:[#allocation5 + $0x3d8] sm:$0xff]
    %v209 = vld [vmem:[#allocation5 + $0x3f0] sm:$0xff]
    %v210 = vld [vmem:[#allocation5 + $0x3f8] sm:$0xff]
    %v211 = vld [vmem:[#allocation7] sm:$0xff]
    %v212 = vld [vmem:[#allocation7 + $0x20] sm:$0xff]
    %v213 = vld [vmem:[#allocation7 + $0x40] sm:$0xff]
    %v214 = vld [vmem:[#allocation7 + $0x60] sm:$0xff]
    %v215 = vld [vmem:[#allocation7 + $0x80] sm:$0xff]
    %v216 = vld [vmem:[#allocation7 + $0xa0] sm:$0xff]
    %v217 = vld [vmem:[#allocation7 + $0xc0] sm:$0xff]
    %v218 = vld [vmem:[#allocation7 + $0xe0] sm:$0xff]
    %v219 = vld [vmem:[#allocation7 + $0x100] sm:$0xff]
    %v220 = vld [vmem:[#allocation7 + $0x120] sm:$0xff]
    %v221 = vld [vmem:[#allocation7 + $0x140] sm:$0xff]
    %v222 = vld [vmem:[#allocation7 + $0x160] sm:$0xff]
    %v223 = vld [vmem:[#allocation7 + $0x180] sm:$0xff]
    %v224 = vld [vmem:[#allocation7 + $0x1a0] sm:$0xff]
    %v225 = vld [vmem:[#allocation7 + $0x1c0] sm:$0xff]
    %v226 = vld [vmem:[#allocation7 + $0x1e0] sm:$0xff]
    %v227 = vld [vmem:[#allocation7 + $0x200] sm:$0xff]
    %v228 = vld [vmem:[#allocation7 + $0x220] sm:$0xff]
    %v229 = vld [vmem:[#allocation7 + $0x240] sm:$0xff]
    %v230 = vld [vmem:[#allocation7 + $0x260] sm:$0xff]
    %v231 = vld [vmem:[#allocation7 + $0x280] sm:$0xff]
    %v232 = vld [vmem:[#allocation7 + $0x2a0] sm:$0xff]
    %v233 = vld [vmem:[#allocation7 + $0x2c0] sm:$0xff]
    %v234 = vld [vmem:[#allocation7 + $0x2e0] sm:$0xff]
    %v235 = vld [vmem:[#allocation7 + $0x300] sm:$0xff]
    %v236 = vld [vmem:[#allocation7 + $0x320] sm:$0xff]
    %v237 = vld [vmem:[#allocation7 + $0x340] sm:$0xff]
    %v238 = vld [vmem:[#allocation7 + $0x360] sm:$0xff]
    %v239 = vld [vmem:[#allocation7 + $0x380] sm:$0xff]
    %v240 = vld [vmem:[#allocation7 + $0x3a0] sm:$0xff]
    %v241 = vld [vmem:[#allocation7 + $0x3c0] sm:$0xff]
    %v242 = vld [vmem:[#allocation7 + $0x3e0] sm:$0xff]
    %v243 = vld [vmem:[#allocation7 + $0x400] sm:$0xff]
    %v244 = vld [vmem:[#allocation7 + $0x420] sm:$0xff]
    %v245 = vld [vmem:[#allocation7 + $0x440] sm:$0xff]
    %v246 = vld [vmem:[#allocation7 + $0x460] sm:$0xff]
    %v247 = vld [vmem:[#allocation7 + $0x480] sm:$0xff]
    %v248 = vld [vmem:[#allocation7 + $0x4a0] sm:$0xff]
    %v249 = vld [vmem:[#allocation7 + $0x4c0] sm:$0xff]
    %v250 = vld [vmem:[#allocation7 + $0x4e0] sm:$0xff]
    %v251 = vld [vmem:[#allocation7 + $0x500] sm:$0xff]
    %v252 = vld [vmem:[#allocation7 + $0x520] sm:$0xff]
    %v253 = vld [vmem:[#allocation7 + $0x540] sm:$0xff]
    %v254 = vld [vmem:[#allocation7 + $0x560] sm:$0xff]
    %v255 = vld [vmem:[#allocation7 + $0x580] sm:$0xff]
    %v256 = vld [vmem:[#allocation7 + $0x5a0] sm:$0xff]
    %v257 = vld [vmem:[#allocation7 + $0x5c0] sm:$0xff]
    %v258 = vld [vmem:[#allocation7 + $0x5e0] sm:$0xff]
    %v259 = vld [vmem:[#allocation7 + $0x600] sm:$0xff]
    %v260 = vld [vmem:[#allocation7 + $0x620] sm:$0xff]
    %v261 = vld [vmem:[#allocation7 + $0x640] sm:$0xff]
    %v262 = vld [vmem:[#allocation7 + $0x660] sm:$0xff]
    %v263 = vld [vmem:[#allocation7 + $0x680] sm:$0xff]
    %v264 = vld [vmem:[#allocation7 + $0x6a0] sm:$0xff]
    %v265 = vld [vmem:[#allocation7 + $0x6c0] sm:$0xff]
    %v266 = vld [vmem:[#allocation7 + $0x6e0] sm:$0xff]
    %v267 = vld [vmem:[#allocation7 + $0x700] sm:$0xff]
    %v268 = vld [vmem:[#allocation7 + $0x720] sm:$0xff]
    %v269 = vld [vmem:[#allocation7 + $0x740] sm:$0xff]
    %v270 = vld [vmem:[#allocation7 + $0x760] sm:$0xff]
    %v271 = vld [vmem:[#allocation7 + $0x780] sm:$0xff]
    %v272 = vld [vmem:[#allocation7 + $0x7a0] sm:$0xff]
    %v273 = vld [vmem:[#allocation7 + $0x7c0] sm:$0xff]
    %v274 = vld [vmem:[#allocation7 + $0x7e0] sm:$0xff]
    %v275 = vld [vmem:[#allocation7 + $0x8] sm:$0xff]
    %v276 = vld [vmem:[#allocation7 + $0x10] sm:$0xff]
    %v277 = vld [vmem:[#allocation7 + $0x28] sm:$0xff]
    %v278 = vld [vmem:[#allocation7 + $0x30] sm:$0xff]
    %v279 = vld [vmem:[#allocation7 + $0x48] sm:$0xff]
    %v280 = vld [vmem:[#allocation7 + $0x50] sm:$0xff]
    %v281 = vld [vmem:[#allocation7 + $0x68] sm:$0xff]
    %v282 = vld [vmem:[#allocation7 + $0x70] sm:$0xff]
    %v283 = vld [vmem:[#allocation7 + $0x88] sm:$0xff]
    %v284 = vld [vmem:[#allocation7 + $0x90] sm:$0xff]
    %v285 = vld [vmem:[#allocation7 + $0xa8] sm:$0xff]
    %v286 = vld [vmem:[#allocation7 + $0xb0] sm:$0xff]
    %v287 = vld [vmem:[#allocation7 + $0xc8] sm:$0xff]
    %v288 = vld [vmem:[#allocation7 + $0xd0] sm:$0xff]
    %v289 = vld [vmem:[#allocation7 + $0xe8] sm:$0xff]
    %v290 = vld [vmem:[#allocation7 + $0xf0] sm:$0xff]
    %v291 = vld [vmem:[#allocation7 + $0x108] sm:$0xff]
    %v292 = vld [vmem:[#allocation7 + $0x110] sm:$0xff]
    %v293 = vld [vmem:[#allocation7 + $0x128] sm:$0xff]
    %v294 = vld [vmem:[#allocation7 + $0x130] sm:$0xff]
    %v295 = vld [vmem:[#allocation7 + $0x148] sm:$0xff]
    %v296 = vld [vmem:[#allocation7 + $0x150] sm:$0xff]
    %v297 = vld [vmem:[#allocation7 + $0x168] sm:$0xff]
    %v298 = vld [vmem:[#allocation7 + $0x170] sm:$0xff]
    %v299 = vld [vmem:[#allocation7 + $0x188] sm:$0xff]
    %v300 = vld [vmem:[#allocation7 + $0x190] sm:$0xff]
    %v301 = vld [vmem:[#allocation7 + $0x1a8] sm:$0xff]
    %v302 = vld [vmem:[#allocation7 + $0x1b0] sm:$0xff]
    %v303 = vld [vmem:[#allocation7 + $0x1c8] sm:$0xff]
    %v304 = vld [vmem:[#allocation7 + $0x1d0] sm:$0xff]
    %v305 = vld [vmem:[#allocation7 + $0x1e8] sm:$0xff]
    %v306 = vld [vmem:[#allocation7 + $0x1f0] sm:$0xff]
    %v307 = vld [vmem:[#allocation7 + $0x208] sm:$0xff]
    %v308 = vld [vmem:[#allocation7 + $0x210] sm:$0xff]
    %v309 = vld [vmem:[#allocation7 + $0x228] sm:$0xff]
    %v310 = vld [vmem:[#allocation7 + $0x230] sm:$0xff]
    %v311 = vld [vmem:[#allocation7 + $0x248] sm:$0xff]
    %v312 = vld [vmem:[#allocation7 + $0x250] sm:$0xff]
    %v313 = vld [vmem:[#allocation7 + $0x268] sm:$0xff]
    %v314 = vld [vmem:[#allocation7 + $0x270] sm:$0xff]
    %v315 = vld [vmem:[#allocation7 + $0x288] sm:$0xff]
    %v316 = vld [vmem:[#allocation7 + $0x290] sm:$0xff]
    %v317 = vld [vmem:[#allocation7 + $0x2a8] sm:$0xff]
    %v318 = vld [vmem:[#allocation7 + $0x2b0] sm:$0xff]
    %v319 = vld [vmem:[#allocation7 + $0x2c8] sm:$0xff]
    %v320 = vld [vmem:[#allocation7 + $0x2d0] sm:$0xff]
    %v321 = vld [vmem:[#allocation7 + $0x2e8] sm:$0xff]
    %v322 = vld [vmem:[#allocation7 + $0x2f0] sm:$0xff]
    %v323 = vld [vmem:[#allocation7 + $0x308] sm:$0xff]
    %v324 = vld [vmem:[#allocation7 + $0x310] sm:$0xff]
    %v325 = vld [vmem:[#allocation7 + $0x328] sm:$0xff]
    %v326 = vld [vmem:[#allocation7 + $0x330] sm:$0xff]
    %v327 = vld [vmem:[#allocation7 + $0x348] sm:$0xff]
    %v328 = vld [vmem:[#allocation7 + $0x350] sm:$0xff]
    %v329 = vld [vmem:[#allocation7 + $0x368] sm:$0xff]
    %v330 = vld [vmem:[#allocation7 + $0x370] sm:$0xff]
    %v331 = vld [vmem:[#allocation7 + $0x388] sm:$0xff]
    %v332 = vld [vmem:[#allocation7 + $0x390] sm:$0xff]
    %v333 = vld [vmem:[#allocation7 + $0x3a8] sm:$0xff]
    %v334 = vld [vmem:[#allocation7 + $0x3b0] sm:$0xff]
    %v335 = vld [vmem:[#allocation7 + $0x3c8] sm:$0xff]
    %v336 = vld [vmem:[#allocation7 + $0x3d0] sm:$0xff]
    %v337 = vld [vmem:[#allocation7 + $0x3e8] sm:$0xff]
    %v338 = vld [vmem:[#allocation7 + $0x3f0] sm:$0xff]
    %v339 = vld [vmem:[#allocation7 + $0x408] sm:$0xff]
    %v340 = vld [vmem:[#allocation7 + $0x410] sm:$0xff]
    %v341 = vld [vmem:[#allocation7 + $0x428] sm:$0xff]
    %v342 = vld [vmem:[#allocation7 + $0x430] sm:$0xff]
    %v343 = vld [vmem:[#allocation7 + $0x448] sm:$0xff]
    %v344 = vld [vmem:[#allocation7 + $0x450] sm:$0xff]
    %v345 = vld [vmem:[#allocation7 + $0x468] sm:$0xff]
    %v346 = vld [vmem:[#allocation7 + $0x470] sm:$0xff]
    %v347 = vld [vmem:[#allocation7 + $0x488] sm:$0xff]
    %v348 = vld [vmem:[#allocation7 + $0x490] sm:$0xff]
    %v349 = vld [vmem:[#allocation7 + $0x4a8] sm:$0xff]
    %v350 = vld [vmem:[#allocation7 + $0x4b0] sm:$0xff]
    %v351 = vld [vmem:[#allocation7 + $0x4c8] sm:$0xff]
    %v352 = vld [vmem:[#allocation7 + $0x4d0] sm:$0xff]
    %v353 = vld [vmem:[#allocation7 + $0x4e8] sm:$0xff]
    %v354 = vld [vmem:[#allocation7 + $0x4f0] sm:$0xff]
    %v355 = vld [vmem:[#allocation7 + $0x508] sm:$0xff]
    %v356 = vld [vmem:[#allocation7 + $0x510] sm:$0xff]
    %v357 = vld [vmem:[#allocation7 + $0x528] sm:$0xff]
    %v358 = vld [vmem:[#allocation7 + $0x530] sm:$0xff]
    %v359 = vld [vmem:[#allocation7 + $0x548] sm:$0xff]
    %v360 = vld [vmem:[#allocation7 + $0x550] sm:$0xff]
    %v361 = vld [vmem:[#allocation7 + $0x568] sm:$0xff]
    %v362 = vld [vmem:[#allocation7 + $0x570] sm:$0xff]
    %v363 = vld [vmem:[#allocation7 + $0x588] sm:$0xff]
    %v364 = vld [vmem:[#allocation7 + $0x590] sm:$0xff]
    %v365 = vld [vmem:[#allocation7 + $0x5a8] sm:$0xff]
    %v366 = vld [vmem:[#allocation7 + $0x5b0] sm:$0xff]
    %v367 = vld [vmem:[#allocation7 + $0x5c8] sm:$0xff]
    %v368 = vld [vmem:[#allocation7 + $0x5d0] sm:$0xff]
    %v369 = vld [vmem:[#allocation7 + $0x5e8] sm:$0xff]
    %v370 = vld [vmem:[#allocation7 + $0x5f0] sm:$0xff]
    %v371 = vld [vmem:[#allocation7 + $0x608] sm:$0xff]
    %v372 = vld [vmem:[#allocation7 + $0x610] sm:$0xff]
    %v373 = vld [vmem:[#allocation7 + $0x628] sm:$0xff]
    %v374 = vld [vmem:[#allocation7 + $0x630] sm:$0xff]
    %v375 = vld [vmem:[#allocation7 + $0x648] sm:$0xff]
    %v376 = vld [vmem:[#allocation7 + $0x650] sm:$0xff]
    %v377 = vld [vmem:[#allocation7 + $0x668] sm:$0xff]
    %v378 = vld [vmem:[#allocation7 + $0x670] sm:$0xff]
    %v379 = vld [vmem:[#allocation7 + $0x688] sm:$0xff]
    %v380 = vld [vmem:[#allocation7 + $0x690] sm:$0xff]
    %v381 = vld [vmem:[#allocation7 + $0x6a8] sm:$0xff]
    %v382 = vld [vmem:[#allocation7 + $0x6b0] sm:$0xff]
    %v383 = vld [vmem:[#allocation7 + $0x6c8] sm:$0xff]
    %v384 = vld [vmem:[#allocation7 + $0x6d0] sm:$0xff]
    %v385 = vld [vmem:[#allocation7 + $0x6e8] sm:$0xff]
    %v386 = vld [vmem:[#allocation7 + $0x6f0] sm:$0xff]
    %v387 = vld [vmem:[#allocation7 + $0x708] sm:$0xff]
    %v388 = vld [vmem:[#allocation7 + $0x710] sm:$0xff]
    %v389 = vld [vmem:[#allocation7 + $0x728] sm:$0xff]
    %v390 = vld [vmem:[#allocation7 + $0x730] sm:$0xff]
    %v391 = vld [vmem:[#allocation7 + $0x748] sm:$0xff]
    %v392 = vld [vmem:[#allocation7 + $0x750] sm:$0xff]
    %v393 = vld [vmem:[#allocation7 + $0x768] sm:$0xff]
    %v394 = vld [vmem:[#allocation7 + $0x770] sm:$0xff]
    %v395 = vld [vmem:[#allocation7 + $0x788] sm:$0xff]
    %v396 = vld [vmem:[#allocation7 + $0x790] sm:$0xff]
    %v397 = vld [vmem:[#allocation7 + $0x7a8] sm:$0xff]
    %v398 = vld [vmem:[#allocation7 + $0x7b0] sm:$0xff]
    %v399 = vld [vmem:[#allocation7 + $0x7c8] sm:$0xff]
    %v400 = vld [vmem:[#allocation7 + $0x7d0] sm:$0xff]
    %v401 = vld [vmem:[#allocation7 + $0x7e8] sm:$0xff]
    %v402 = vld [vmem:[#allocation7 + $0x7f0] sm:$0xff]
    %v403 = vld [vmem:[#allocation7 + $0x18] sm:$0xff]
    %v404 = vld [vmem:[#allocation7 + $0x38] sm:$0xff]
    %v405 = vld [vmem:[#allocation7 + $0x58] sm:$0xff]
    %v406 = vld [vmem:[#allocation7 + $0x78] sm:$0xff]
    %v407 = vld [vmem:[#allocation7 + $0x98] sm:$0xff]
    %v408 = vld [vmem:[#allocation7 + $0xb8] sm:$0xff]
    %v409 = vld [vmem:[#allocation7 + $0xd8] sm:$0xff]
    %v410 = vld [vmem:[#allocation7 + $0xf8] sm:$0xff]
    %v411 = vld [vmem:[#allocation7 + $0x118] sm:$0xff]
    %v412 = vld [vmem:[#allocation7 + $0x138] sm:$0xff]
    %v413 = vld [vmem:[#allocation7 + $0x158] sm:$0xff]
    %v414 = vld [vmem:[#allocation7 + $0x178] sm:$0xff]
    %v415 = vld [vmem:[#allocation7 + $0x198] sm:$0xff]
    %v416 = vld [vmem:[#allocation7 + $0x1b8] sm:$0xff]
    %v417 = vld [vmem:[#allocation7 + $0x1d8] sm:$0xff]
    %v418 = vld [vmem:[#allocation7 + $0x1f8] sm:$0xff]
    %v419 = vld [vmem:[#allocation7 + $0x218] sm:$0xff]
    %v420 = vld [vmem:[#allocation7 + $0x238] sm:$0xff]
    %v421 = vld [vmem:[#allocation7 + $0x258] sm:$0xff]
    %v422 = vld [vmem:[#allocation7 + $0x278] sm:$0xff]
    %v423 = vld [vmem:[#allocation7 + $0x298] sm:$0xff]
    %v424 = vld [vmem:[#allocation7 + $0x2b8] sm:$0xff]
    %v425 = vld [vmem:[#allocation7 + $0x2d8] sm:$0xff]
    %v426 = vld [vmem:[#allocation7 + $0x2f8] sm:$0xff]
    %v427 = vld [vmem:[#allocation7 + $0x318] sm:$0xff]
    %v428 = vld [vmem:[#allocation7 + $0x338] sm:$0xff]
    %v429 = vld [vmem:[#allocation7 + $0x358] sm:$0xff]
    %v430 = vld [vmem:[#allocation7 + $0x378] sm:$0xff]
    %v431 = vld [vmem:[#allocation7 + $0x398] sm:$0xff]
    %v432 = vld [vmem:[#allocation7 + $0x3b8] sm:$0xff]
    %v433 = vld [vmem:[#allocation7 + $0x3d8] sm:$0xff]
    %v434 = vld [vmem:[#allocation7 + $0x3f8] sm:$0xff]
    %v435 = vld [vmem:[#allocation7 + $0x418] sm:$0xff]
    %v436 = vld [vmem:[#allocation7 + $0x438] sm:$0xff]
    %v437 = vld [vmem:[#allocation7 + $0x458] sm:$0xff]
    %v438 = vld [vmem:[#allocation7 + $0x478] sm:$0xff]
    %v439 = vld [vmem:[#allocation7 + $0x498] sm:$0xff]
    %v440 = vld [vmem:[#allocation7 + $0x4b8] sm:$0xff]
    %v441 = vld [vmem:[#allocation7 + $0x4d8] sm:$0xff]
    %v442 = vld [vmem:[#allocation7 + $0x4f8] sm:$0xff]
    %v443 = vld [vmem:[#allocation7 + $0x518] sm:$0xff]
    %v444 = vld [vmem:[#allocation7 + $0x538] sm:$0xff]
    %v445 = vld [vmem:[#allocation7 + $0x558] sm:$0xff]
    %v446 = vld [vmem:[#allocation7 + $0x578] sm:$0xff]
    %v447 = vld [vmem:[#allocation7 + $0x598] sm:$0xff]
    %v448 = vld [vmem:[#allocation7 + $0x5b8] sm:$0xff]
    %v449 = vld [vmem:[#allocation7 + $0x5d8] sm:$0xff]
    %v450 = vld [vmem:[#allocation7 + $0x5f8] sm:$0xff]
    %v451 = vld [vmem:[#allocation7 + $0x618] sm:$0xff]
    %v452 = vld [vmem:[#allocation7 + $0x638] sm:$0xff]
    %v453 = vld [vmem:[#allocation7 + $0x658] sm:$0xff]
    %v454 = vld [vmem:[#allocation7 + $0x678] sm:$0xff]
    %v455 = vld [vmem:[#allocation7 + $0x698] sm:$0xff]
    %v456 = vld [vmem:[#allocation7 + $0x6b8] sm:$0xff]
    %v457 = vld [vmem:[#allocation7 + $0x6d8] sm:$0xff]
    %v458 = vld [vmem:[#allocation7 + $0x6f8] sm:$0xff]
    %v459 = vld [vmem:[#allocation7 + $0x718] sm:$0xff]
    %v460 = vld [vmem:[#allocation7 + $0x738] sm:$0xff]
    %v461 = vld [vmem:[#allocation7 + $0x758] sm:$0xff]
    %v462 = vld [vmem:[#allocation7 + $0x778] sm:$0xff]
    %v463 = vld [vmem:[#allocation7 + $0x798] sm:$0xff]
    %v464 = vld [vmem:[#allocation7 + $0x7b8] sm:$0xff]
    %v465 = vld [vmem:[#allocation7 + $0x7d8] sm:$0xff]
    %v466 = vld [vmem:[#allocation7 + $0x7f8] sm:$0xff]
    %v467 = vld [vmem:[#allocation8] ss:$8 sm:$0xf]
    %s468 = scalar_lea.vmem [#allocation8], 1
    %v469 = vld [vmem:[%s468] ss:$8 sm:$0x3]
    %s470 = scalar_lea.vmem [#allocation8], 2
    %v471 = vld [vmem:[%s470] ss:$8 sm:$0xf]
    %s472 = scalar_lea.vmem [#allocation8], 3
    %v473 = vld [vmem:[%s472] ss:$8 sm:$0xf]
    %s474 = scalar_lea.vmem [#allocation8], 4
    %v475 = vld [vmem:[%s474] ss:$8 sm:$0xf]
    %s476 = scalar_lea.vmem [#allocation8], 5
    %v477 = vld [vmem:[%s476] ss:$8 sm:$0xf]
    %s478 = scalar_lea.vmem [#allocation8], 6
    %v479 = vld [vmem:[%s478] ss:$8 sm:$0xf]
    %s480 = scalar_lea.vmem [#allocation8], 7
    %v481 = vld [vmem:[%s480] ss:$8 sm:$0xf]
    %s482 = scalar_lea.vmem [#allocation8], 32
    %v483 = vld [vmem:[%s482] ss:$8 sm:$0x3]
    %v485 = vperm.slane %v467, 0
    %v486 = vperm.slane %v467, 1
    %v487 = vperm.slane %v467, 2
    %v488 = vperm.slane %v467, 3
    %v557 = vunpack.c.l.b16 %v83
    %v558 = vunpack.c.h.b16 %v83
    %v559 = vunpack.c.l.b16 %v84
    %v560 = vunpack.c.h.b16 %v84
    %v561 = vunpack.c.l.b16 %v85
    %v562 = vunpack.c.h.b16 %v85
    %v563 = vunpack.c.l.b16 %v86
    %v564 = vunpack.c.h.b16 %v86
    %v565 = vunpack.c.l.b16 %v87
    %v566 = vunpack.c.h.b16 %v87
    %v567 = vunpack.c.l.b16 %v88
    %v568 = vunpack.c.h.b16 %v88
    %v569 = vunpack.c.l.b16 %v89
    %v570 = vunpack.c.h.b16 %v89
    %v571 = vunpack.c.l.b16 %v90
    %v572 = vunpack.c.h.b16 %v90
    %v573 = vunpack.c.l.b16 %v91
    %v574 = vunpack.c.h.b16 %v91
    %v575 = vunpack.c.l.b16 %v92
    %v576 = vunpack.c.h.b16 %v92
    %v577 = vunpack.c.l.b16 %v93
    %v578 = vunpack.c.h.b16 %v93
    %v579 = vunpack.c.l.b16 %v94
    %v580 = vunpack.c.h.b16 %v94
    %v581 = vunpack.c.l.b16 %v95
    %v582 = vunpack.c.h.b16 %v95
    %v583 = vunpack.c.l.b16 %v96
    %v584 = vunpack.c.h.b16 %v96
    %v585 = vunpack.c.l.b16 %v97
    %v586 = vunpack.c.h.b16 %v97
    %v587 = vunpack.c.l.b16 %v98
    %v588 = vunpack.c.h.b16 %v98
    %v589 = vunpack.c.l.b16 %v99
    %v590 = vunpack.c.h.b16 %v99
    %v591 = vunpack.c.l.b16 %v100
    %v592 = vunpack.c.h.b16 %v100
    %v593 = vunpack.c.l.b16 %v101
    %v594 = vunpack.c.h.b16 %v101
    %v595 = vunpack.c.l.b16 %v102
    %v596 = vunpack.c.h.b16 %v102
    %v597 = vunpack.c.l.b16 %v103
    %v598 = vunpack.c.h.b16 %v103
    %v599 = vunpack.c.l.b16 %v104
    %v600 = vunpack.c.h.b16 %v104
    %v601 = vunpack.c.l.b16 %v105
    %v602 = vunpack.c.h.b16 %v105
    %v603 = vunpack.c.l.b16 %v106
    %v604 = vunpack.c.h.b16 %v106
    %v605 = vunpack.c.l.b16 %v107
    %v606 = vunpack.c.h.b16 %v107
    %v607 = vunpack.c.l.b16 %v108
    %v608 = vunpack.c.h.b16 %v108
    %v609 = vunpack.c.l.b16 %v109
    %v610 = vunpack.c.h.b16 %v109
    %v611 = vunpack.c.l.b16 %v110
    %v612 = vunpack.c.h.b16 %v110
    %v613 = vunpack.c.l.b16 %v111
    %v614 = vunpack.c.h.b16 %v111
    %v615 = vunpack.c.l.b16 %v112
    %v616 = vunpack.c.h.b16 %v112
    %v617 = vunpack.c.l.b16 %v113
    %v618 = vunpack.c.h.b16 %v113
    %v619 = vunpack.c.l.b16 %v114
    %v620 = vunpack.c.h.b16 %v114
    %v621 = vunpack.c.l.b16 %v115
    %v622 = vunpack.c.h.b16 %v115
    %v623 = vunpack.c.l.b16 %v116
    %v624 = vunpack.c.h.b16 %v116
    %v625 = vunpack.c.l.b16 %v117
    %v626 = vunpack.c.h.b16 %v117
    %v627 = vunpack.c.l.b16 %v118
    %v628 = vunpack.c.h.b16 %v118
    %v629 = vunpack.c.l.b16 %v119
    %v630 = vunpack.c.h.b16 %v119
    %v631 = vunpack.c.l.b16 %v120
    %v632 = vunpack.c.h.b16 %v120
    %v633 = vunpack.c.l.b16 %v121
    %v634 = vunpack.c.h.b16 %v121
    %v635 = vunpack.c.l.b16 %v122
    %v636 = vunpack.c.h.b16 %v122
    %v637 = vunpack.c.l.b16 %v123
    %v638 = vunpack.c.h.b16 %v123
    %v639 = vunpack.c.l.b16 %v124
    %v640 = vunpack.c.h.b16 %v124
    %v641 = vunpack.c.l.b16 %v125
    %v642 = vunpack.c.h.b16 %v125
    %v643 = vunpack.c.l.b16 %v126
    %v644 = vunpack.c.h.b16 %v126
    %v645 = vunpack.c.l.b16 %v127
    %v646 = vunpack.c.h.b16 %v127
    %v647 = vunpack.c.l.b16 %v128
    %v648 = vunpack.c.h.b16 %v128
    %v649 = vunpack.c.l.b16 %v129
    %v650 = vunpack.c.h.b16 %v129
    %v651 = vunpack.c.l.b16 %v130
    %v652 = vunpack.c.h.b16 %v130
    %v653 = vunpack.c.l.b16 %v131
    %v654 = vunpack.c.h.b16 %v131
    %v655 = vunpack.c.l.b16 %v132
    %v656 = vunpack.c.h.b16 %v132
    %v657 = vunpack.c.l.b16 %v133
    %v658 = vunpack.c.h.b16 %v133
    %v659 = vunpack.c.l.b16 %v134
    %v660 = vunpack.c.h.b16 %v134
    %v661 = vunpack.c.l.b16 %v135
    %v662 = vunpack.c.h.b16 %v135
    %v663 = vunpack.c.l.b16 %v136
    %v664 = vunpack.c.h.b16 %v136
    %v665 = vunpack.c.l.b16 %v137
    %v666 = vunpack.c.h.b16 %v137
    %v667 = vunpack.c.l.b16 %v138
    %v668 = vunpack.c.h.b16 %v138
    %v669 = vunpack.c.l.b16 %v139
    %v670 = vunpack.c.h.b16 %v139
    %v671 = vunpack.c.l.b16 %v140
    %v672 = vunpack.c.h.b16 %v140
    %v673 = vunpack.c.l.b16 %v141
    %v674 = vunpack.c.h.b16 %v141
    %v675 = vunpack.c.l.b16 %v142
    %v676 = vunpack.c.h.b16 %v142
    %v677 = vunpack.c.l.b16 %v143
    %v678 = vunpack.c.h.b16 %v143
    %v679 = vunpack.c.l.b16 %v144
    %v680 = vunpack.c.h.b16 %v144
    %v681 = vunpack.c.l.b16 %v145
    %v682 = vunpack.c.h.b16 %v145
    %v683 = vunpack.c.l.b16 %v146
    %v684 = vunpack.c.h.b16 %v146
    %v685 = vpack.c.b16 %v561, %v557
    %v686 = vpack.c.b16 %v562, %v558
    %v687 = vpack.c.b16 %v563, %v559
    %v688 = vpack.c.b16 %v564, %v560
    %v689 = vpack.c.b16 %v569, %v565
    %v690 = vpack.c.b16 %v570, %v566
    %v691 = vpack.c.b16 %v571, %v567
    %v692 = vpack.c.b16 %v572, %v568
    %v693 = vpack.c.b16 %v577, %v573
    %v694 = vpack.c.b16 %v578, %v574
    %v695 = vpack.c.b16 %v579, %v575
    %v696 = vpack.c.b16 %v580, %v576
    %v697 = vpack.c.b16 %v585, %v581
    %v698 = vpack.c.b16 %v586, %v582
    %v699 = vpack.c.b16 %v587, %v583
    %v700 = vpack.c.b16 %v588, %v584
    %v701 = vpack.c.b16 %v593, %v589
    %v702 = vpack.c.b16 %v594, %v590
    %v703 = vpack.c.b16 %v595, %v591
    %v704 = vpack.c.b16 %v596, %v592
    %v705 = vpack.c.b16 %v601, %v597
    %v706 = vpack.c.b16 %v602, %v598
    %v707 = vpack.c.b16 %v603, %v599
    %v708 = vpack.c.b16 %v604, %v600
    %v709 = vpack.c.b16 %v609, %v605
    %v710 = vpack.c.b16 %v610, %v606
    %v711 = vpack.c.b16 %v611, %v607
    %v712 = vpack.c.b16 %v612, %v608
    %v713 = vpack.c.b16 %v617, %v613
    %v714 = vpack.c.b16 %v618, %v614
    %v715 = vpack.c.b16 %v619, %v615
    %v716 = vpack.c.b16 %v620, %v616
    %v717 = vpack.c.b16 %v625, %v621
    %v718 = vpack.c.b16 %v626, %v622
    %v719 = vpack.c.b16 %v627, %v623
    %v720 = vpack.c.b16 %v628, %v624
    %v721 = vpack.c.b16 %v633, %v629
    %v722 = vpack.c.b16 %v634, %v630
    %v723 = vpack.c.b16 %v635, %v631
    %v724 = vpack.c.b16 %v636, %v632
    %v725 = vpack.c.b16 %v641, %v637
    %v726 = vpack.c.b16 %v642, %v638
    %v727 = vpack.c.b16 %v643, %v639
    %v728 = vpack.c.b16 %v644, %v640
    %v729 = vpack.c.b16 %v649, %v645
    %v730 = vpack.c.b16 %v650, %v646
    %v731 = vpack.c.b16 %v651, %v647
    %v732 = vpack.c.b16 %v652, %v648
    %v733 = vpack.c.b16 %v657, %v653
    %v734 = vpack.c.b16 %v658, %v654
    %v735 = vpack.c.b16 %v659, %v655
    %v736 = vpack.c.b16 %v660, %v656
    %v737 = vpack.c.b16 %v665, %v661
    %v738 = vpack.c.b16 %v666, %v662
    %v739 = vpack.c.b16 %v667, %v663
    %v740 = vpack.c.b16 %v668, %v664
    %v741 = vpack.c.b16 %v673, %v669
    %v742 = vpack.c.b16 %v674, %v670
    %v743 = vpack.c.b16 %v675, %v671
    %v744 = vpack.c.b16 %v676, %v672
    %v745 = vpack.c.b16 %v681, %v677
    %v746 = vpack.c.b16 %v682, %v678
    %v747 = vpack.c.b16 %v683, %v679
    %v748 = vpack.c.b16 %v684, %v680
    %813 = vmatpush.bf16.msra.mxu0 %v713
    %814 = vmatpush.bf16.msra.mxu0 %v709
    %815 = vmatpush.bf16.msra.mxu0 %v705
    %816 = vmatpush.bf16.msra.mxu0 %v701
    %817 = vmatpush.bf16.msra.mxu0 %v697
    %818 = vmatpush.bf16.msra.mxu0 %v693
    %819 = vmatpush.bf16.msra.mxu0 %v689
    %820 = vmatpush.bf16.msra.mxu0 %v685
    %821 = vmatmul.bf16.gmra.mxu0 %v81
    %v822 = vpop.f32.mrf.mxu0
    %v823 = vadd.f32 %v485, %v822
    %v824 = vpop.f32.mrf.mxu0
    %825 = vdwg.mxu0
    %826 = vmatpush.bf16.msra.mxu0 %v745
    %827 = vmatpush.bf16.msra.mxu0 %v741
    %828 = vmatpush.bf16.msra.mxu0 %v737
    %829 = vmatpush.bf16.msra.mxu0 %v733
    %830 = vmatpush.bf16.msra.mxu0 %v729
    %831 = vmatpush.bf16.msra.mxu0 %v725
    %832 = vmatpush.bf16.msra.mxu0 %v721
    %833 = vmatpush.bf16.msra.mxu0 %v717
    %834 = vmatmul.bf16.gmra.mxu0 %v82
    %v835 = vpop.f32.mrf.mxu0
    %v836 = vadd.f32 %v823, %v835
    %v837 = vpop.f32.mrf.mxu0
    %838 = vdwg.mxu0
    %839 = vmatpush.bf16.msra.mxu0 %v714
    %840 = vmatpush.bf16.msra.mxu0 %v710
    %841 = vmatpush.bf16.msra.mxu0 %v706
    %842 = vmatpush.bf16.msra.mxu0 %v702
    %843 = vmatpush.bf16.msra.mxu0 %v698
    %844 = vmatpush.bf16.msra.mxu0 %v694
    %845 = vmatpush.bf16.msra.mxu0 %v690
    %846 = vmatpush.bf16.msra.mxu0 %v686
    %847 = vmatmul.bf16.gmra.mxu0 %v81
    %v848 = vpop.f32.mrf.mxu0
    %v849 = vadd.f32 %v486, %v848
    %v850 = vpop.f32.mrf.mxu0
    %851 = vdwg.mxu0
    %852 = vmatpush.bf16.msra.mxu0 %v746
    %853 = vmatpush.bf16.msra.mxu0 %v742
    %854 = vmatpush.bf16.msra.mxu0 %v738
    %855 = vmatpush.bf16.msra.mxu0 %v734
    %856 = vmatpush.bf16.msra.mxu0 %v730
    %857 = vmatpush.bf16.msra.mxu0 %v726
    %858 = vmatpush.bf16.msra.mxu0 %v722
    %859 = vmatpush.bf16.msra.mxu0 %v718
    %860 = vmatmul.bf16.gmra.mxu0 %v82
    %v861 = vpop.f32.mrf.mxu0
    %v862 = vadd.f32 %v849, %v861
    %v863 = vpop.f32.mrf.mxu0
    %864 = vdwg.mxu0
    %865 = vmatpush.bf16.msra.mxu0 %v715
    %866 = vmatpush.bf16.msra.mxu0 %v711
    %867 = vmatpush.bf16.msra.mxu0 %v707
    %868 = vmatpush.bf16.msra.mxu0 %v703
    %869 = vmatpush.bf16.msra.mxu0 %v699
    %870 = vmatpush.bf16.msra.mxu0 %v695
    %871 = vmatpush.bf16.msra.mxu0 %v691
    %872 = vmatpush.bf16.msra.mxu0 %v687
    %873 = vmatmul.bf16.gmra.mxu0 %v81
    %v874 = vpop.f32.mrf.mxu0
    %v875 = vadd.f32 %v487, %v874
    %v876 = vpop.f32.mrf.mxu0
    %877 = vdwg.mxu0
    %878 = vmatpush.bf16.msra.mxu0 %v747
    %879 = vmatpush.bf16.msra.mxu0 %v743
    %880 = vmatpush.bf16.msra.mxu0 %v739
    %881 = vmatpush.bf16.msra.mxu0 %v735
    %882 = vmatpush.bf16.msra.mxu0 %v731
    %883 = vmatpush.bf16.msra.mxu0 %v727
    %884 = vmatpush.bf16.msra.mxu0 %v723
    %885 = vmatpush.bf16.msra.mxu0 %v719
    %886 = vmatmul.bf16.gmra.mxu0 %v82
    %v887 = vpop.f32.mrf.mxu0
    %v888 = vadd.f32 %v875, %v887
    %v889 = vpop.f32.mrf.mxu0
    %890 = vdwg.mxu0
    %891 = vmatpush.bf16.msra.mxu0 %v716
    %892 = vmatpush.bf16.msra.mxu0 %v712
    %893 = vmatpush.bf16.msra.mxu0 %v708
    %894 = vmatpush.bf16.msra.mxu0 %v704
    %895 = vmatpush.bf16.msra.mxu0 %v700
    %896 = vmatpush.bf16.msra.mxu0 %v696
    %897 = vmatpush.bf16.msra.mxu0 %v692
    %898 = vmatpush.bf16.msra.mxu0 %v688
    %899 = vmatmul.bf16.gmra.mxu0 %v81
    %v900 = vpop.f32.mrf.mxu0
    %v901 = vadd.f32 %v488, %v900
    %v902 = vpop.f32.mrf.mxu0
    %903 = vdwg.mxu0
    %904 = vmatpush.bf16.msra.mxu0 %v748
    %905 = vmatpush.bf16.msra.mxu0 %v744
    %906 = vmatpush.bf16.msra.mxu0 %v740
    %907 = vmatpush.bf16.msra.mxu0 %v736
    %908 = vmatpush.bf16.msra.mxu0 %v732
    %909 = vmatpush.bf16.msra.mxu0 %v728
    %910 = vmatpush.bf16.msra.mxu0 %v724
    %911 = vmatpush.bf16.msra.mxu0 %v720
    %912 = vmatmul.bf16.gmra.mxu0 %v82
    %v913 = vpop.f32.mrf.mxu0
    %v914 = vadd.f32 %v901, %v913
    %v915 = vpop.f32.mrf.mxu0
    %916 = vdwg.mxu0
    %v917 = vmax.f32 %v836, 0.0
    %v918 = vmax.f32 %v862, 0.0
    %v919 = vmax.f32 %v888, 0.0
    %v920 = vmax.f32 %v914, 0.0
    %v921 = vpack.c.bf16 %v917, %v917
    %v922 = vpack.c.bf16 %v918, %v918
    %v923 = vpack.c.bf16 %v919, %v919
    %v924 = vpack.c.bf16 %v920, %v920
    %v926 = vperm.slane %v469, 0
    %v927 = vperm.slane %v469, 1
    %v994 = vunpack.c.l.b16 %v211
    %v995 = vunpack.c.h.b16 %v211
    %v996 = vunpack.c.l.b16 %v212
    %v997 = vunpack.c.h.b16 %v212
    %v998 = vunpack.c.l.b16 %v213
    %v999 = vunpack.c.h.b16 %v213
    %v1000 = vunpack.c.l.b16 %v214
    %v1001 = vunpack.c.h.b16 %v214
    %v1002 = vunpack.c.l.b16 %v215
    %v1003 = vunpack.c.h.b16 %v215
    %v1004 = vunpack.c.l.b16 %v216
    %v1005 = vunpack.c.h.b16 %v216
    %v1006 = vunpack.c.l.b16 %v217
    %v1007 = vunpack.c.h.b16 %v217
    %v1008 = vunpack.c.l.b16 %v218
    %v1009 = vunpack.c.h.b16 %v218
    %v1010 = vunpack.c.l.b16 %v219
    %v1011 = vunpack.c.h.b16 %v219
    %v1012 = vunpack.c.l.b16 %v220
    %v1013 = vunpack.c.h.b16 %v220
    %v1014 = vunpack.c.l.b16 %v221
    %v1015 = vunpack.c.h.b16 %v221
    %v1016 = vunpack.c.l.b16 %v222
    %v1017 = vunpack.c.h.b16 %v222
    %v1018 = vunpack.c.l.b16 %v223
    %v1019 = vunpack.c.h.b16 %v223
    %v1020 = vunpack.c.l.b16 %v224
    %v1021 = vunpack.c.h.b16 %v224
    %v1022 = vunpack.c.l.b16 %v225
    %v1023 = vunpack.c.h.b16 %v225
    %v1024 = vunpack.c.l.b16 %v226
    %v1025 = vunpack.c.h.b16 %v226
    %v1026 = vunpack.c.l.b16 %v227
    %v1027 = vunpack.c.h.b16 %v227
    %v1028 = vunpack.c.l.b16 %v228
    %v1029 = vunpack.c.h.b16 %v228
    %v1030 = vunpack.c.l.b16 %v229
    %v1031 = vunpack.c.h.b16 %v229
    %v1032 = vunpack.c.l.b16 %v230
    %v1033 = vunpack.c.h.b16 %v230
    %v1034 = vunpack.c.l.b16 %v231
    %v1035 = vunpack.c.h.b16 %v231
    %v1036 = vunpack.c.l.b16 %v232
    %v1037 = vunpack.c.h.b16 %v232
    %v1038 = vunpack.c.l.b16 %v233
    %v1039 = vunpack.c.h.b16 %v233
    %v1040 = vunpack.c.l.b16 %v234
    %v1041 = vunpack.c.h.b16 %v234
    %v1042 = vunpack.c.l.b16 %v235
    %v1043 = vunpack.c.h.b16 %v235
    %v1044 = vunpack.c.l.b16 %v236
    %v1045 = vunpack.c.h.b16 %v236
    %v1046 = vunpack.c.l.b16 %v237
    %v1047 = vunpack.c.h.b16 %v237
    %v1048 = vunpack.c.l.b16 %v238
    %v1049 = vunpack.c.h.b16 %v238
    %v1050 = vunpack.c.l.b16 %v239
    %v1051 = vunpack.c.h.b16 %v239
    %v1052 = vunpack.c.l.b16 %v240
    %v1053 = vunpack.c.h.b16 %v240
    %v1054 = vunpack.c.l.b16 %v241
    %v1055 = vunpack.c.h.b16 %v241
    %v1056 = vunpack.c.l.b16 %v242
    %v1057 = vunpack.c.h.b16 %v242
    %v1058 = vunpack.c.l.b16 %v243
    %v1059 = vunpack.c.h.b16 %v243
    %v1060 = vunpack.c.l.b16 %v244
    %v1061 = vunpack.c.h.b16 %v244
    %v1062 = vunpack.c.l.b16 %v245
    %v1063 = vunpack.c.h.b16 %v245
    %v1064 = vunpack.c.l.b16 %v246
    %v1065 = vunpack.c.h.b16 %v246
    %v1066 = vunpack.c.l.b16 %v247
    %v1067 = vunpack.c.h.b16 %v247
    %v1068 = vunpack.c.l.b16 %v248
    %v1069 = vunpack.c.h.b16 %v248
    %v1070 = vunpack.c.l.b16 %v249
    %v1071 = vunpack.c.h.b16 %v249
    %v1072 = vunpack.c.l.b16 %v250
    %v1073 = vunpack.c.h.b16 %v250
    %v1074 = vunpack.c.l.b16 %v251
    %v1075 = vunpack.c.h.b16 %v251
    %v1076 = vunpack.c.l.b16 %v252
    %v1077 = vunpack.c.h.b16 %v252
    %v1078 = vunpack.c.l.b16 %v253
    %v1079 = vunpack.c.h.b16 %v253
    %v1080 = vunpack.c.l.b16 %v254
    %v1081 = vunpack.c.h.b16 %v254
    %v1082 = vunpack.c.l.b16 %v255
    %v1083 = vunpack.c.h.b16 %v255
    %v1084 = vunpack.c.l.b16 %v256
    %v1085 = vunpack.c.h.b16 %v256
    %v1086 = vunpack.c.l.b16 %v257
    %v1087 = vunpack.c.h.b16 %v257
    %v1088 = vunpack.c.l.b16 %v258
    %v1089 = vunpack.c.h.b16 %v258
    %v1090 = vunpack.c.l.b16 %v259
    %v1091 = vunpack.c.h.b16 %v259
    %v1092 = vunpack.c.l.b16 %v260
    %v1093 = vunpack.c.h.b16 %v260
    %v1094 = vunpack.c.l.b16 %v261
    %v1095 = vunpack.c.h.b16 %v261
    %v1096 = vunpack.c.l.b16 %v262
    %v1097 = vunpack.c.h.b16 %v262
    %v1098 = vunpack.c.l.b16 %v263
    %v1099 = vunpack.c.h.b16 %v263
    %v1100 = vunpack.c.l.b16 %v264
    %v1101 = vunpack.c.h.b16 %v264
    %v1102 = vunpack.c.l.b16 %v265
    %v1103 = vunpack.c.h.b16 %v265
    %v1104 = vunpack.c.l.b16 %v266
    %v1105 = vunpack.c.h.b16 %v266
    %v1106 = vunpack.c.l.b16 %v267
    %v1107 = vunpack.c.h.b16 %v267
    %v1108 = vunpack.c.l.b16 %v268
    %v1109 = vunpack.c.h.b16 %v268
    %v1110 = vunpack.c.l.b16 %v269
    %v1111 = vunpack.c.h.b16 %v269
    %v1112 = vunpack.c.l.b16 %v270
    %v1113 = vunpack.c.h.b16 %v270
    %v1114 = vunpack.c.l.b16 %v271
    %v1115 = vunpack.c.h.b16 %v271
    %v1116 = vunpack.c.l.b16 %v272
    %v1117 = vunpack.c.h.b16 %v272
    %v1118 = vunpack.c.l.b16 %v273
    %v1119 = vunpack.c.h.b16 %v273
    %v1120 = vunpack.c.l.b16 %v274
    %v1121 = vunpack.c.h.b16 %v274
    %v1122 = vpack.c.b16 %v996, %v994
    %v1123 = vpack.c.b16 %v997, %v995
    %v1124 = vpack.c.b16 %v1000, %v998
    %v1125 = vpack.c.b16 %v1001, %v999
    %v1126 = vpack.c.b16 %v1004, %v1002
    %v1127 = vpack.c.b16 %v1005, %v1003
    %v1128 = vpack.c.b16 %v1008, %v1006
    %v1129 = vpack.c.b16 %v1009, %v1007
    %v1130 = vpack.c.b16 %v1012, %v1010
    %v1131 = vpack.c.b16 %v1013, %v1011
    %v1132 = vpack.c.b16 %v1016, %v1014
    %v1133 = vpack.c.b16 %v1017, %v1015
    %v1134 = vpack.c.b16 %v1020, %v1018
    %v1135 = vpack.c.b16 %v1021, %v1019
    %v1136 = vpack.c.b16 %v1024, %v1022
    %v1137 = vpack.c.b16 %v1025, %v1023
    %v1138 = vpack.c.b16 %v1028, %v1026
    %v1139 = vpack.c.b16 %v1029, %v1027
    %v1140 = vpack.c.b16 %v1032, %v1030
    %v1141 = vpack.c.b16 %v1033, %v1031
    %v1142 = vpack.c.b16 %v1036, %v1034
    %v1143 = vpack.c.b16 %v1037, %v1035
    %v1144 = vpack.c.b16 %v1040, %v1038
    %v1145 = vpack.c.b16 %v1041, %v1039
    %v1146 = vpack.c.b16 %v1044, %v1042
    %v1147 = vpack.c.b16 %v1045, %v1043
    %v1148 = vpack.c.b16 %v1048, %v1046
    %v1149 = vpack.c.b16 %v1049, %v1047
    %v1150 = vpack.c.b16 %v1052, %v1050
    %v1151 = vpack.c.b16 %v1053, %v1051
    %v1152 = vpack.c.b16 %v1056, %v1054
    %v1153 = vpack.c.b16 %v1057, %v1055
    %v1154 = vpack.c.b16 %v1060, %v1058
    %v1155 = vpack.c.b16 %v1061, %v1059
    %v1156 = vpack.c.b16 %v1064, %v1062
    %v1157 = vpack.c.b16 %v1065, %v1063
    %v1158 = vpack.c.b16 %v1068, %v1066
    %v1159 = vpack.c.b16 %v1069, %v1067
    %v1160 = vpack.c.b16 %v1072, %v1070
    %v1161 = vpack.c.b16 %v1073, %v1071
    %v1162 = vpack.c.b16 %v1076, %v1074
    %v1163 = vpack.c.b16 %v1077, %v1075
    %v1164 = vpack.c.b16 %v1080, %v1078
    %v1165 = vpack.c.b16 %v1081, %v1079
    %v1166 = vpack.c.b16 %v1084, %v1082
    %v1167 = vpack.c.b16 %v1085, %v1083
    %v1168 = vpack.c.b16 %v1088, %v1086
    %v1169 = vpack.c.b16 %v1089, %v1087
    %v1170 = vpack.c.b16 %v1092, %v1090
    %v1171 = vpack.c.b16 %v1093, %v1091
    %v1172 = vpack.c.b16 %v1096, %v1094
    %v1173 = vpack.c.b16 %v1097, %v1095
    %v1174 = vpack.c.b16 %v1100, %v1098
    %v1175 = vpack.c.b16 %v1101, %v1099
    %v1176 = vpack.c.b16 %v1104, %v1102
    %v1177 = vpack.c.b16 %v1105, %v1103
    %v1178 = vpack.c.b16 %v1108, %v1106
    %v1179 = vpack.c.b16 %v1109, %v1107
    %v1180 = vpack.c.b16 %v1112, %v1110
    %v1181 = vpack.c.b16 %v1113, %v1111
    %v1182 = vpack.c.b16 %v1116, %v1114
    %v1183 = vpack.c.b16 %v1117, %v1115
    %v1184 = vpack.c.b16 %v1120, %v1118
    %v1185 = vpack.c.b16 %v1121, %v1119
    %1250 = vmatpush.bf16.msra.mxu0 %v1136
    %1251 = vmatpush.bf16.msra.mxu0 %v1134
    %1252 = vmatpush.bf16.msra.mxu0 %v1132
    %1253 = vmatpush.bf16.msra.mxu0 %v1130
    %1254 = vmatpush.bf16.msra.mxu0 %v1128
    %1255 = vmatpush.bf16.msra.mxu0 %v1126
    %1256 = vmatpush.bf16.msra.mxu0 %v1124
    %1257 = vmatpush.bf16.msra.mxu0 %v1122
    %1258 = vmatmul.bf16.gmra.mxu0 %v921
    %v1259 = vpop.f32.mrf.mxu0
    %v1260 = vadd.f32 %v926, %v1259
    %v1261 = vpop.f32.mrf.mxu0
    %1262 = vdwg.mxu0
    %1263 = vmatpush.bf16.msra.mxu0 %v1152
    %1264 = vmatpush.bf16.msra.mxu0 %v1150
    %1265 = vmatpush.bf16.msra.mxu0 %v1148
    %1266 = vmatpush.bf16.msra.mxu0 %v1146
    %1267 = vmatpush.bf16.msra.mxu0 %v1144
    %1268 = vmatpush.bf16.msra.mxu0 %v1142
    %1269 = vmatpush.bf16.msra.mxu0 %v1140
    %1270 = vmatpush.bf16.msra.mxu0 %v1138
    %1271 = vmatmul.bf16.gmra.mxu0 %v922
    %v1272 = vpop.f32.mrf.mxu0
    %v1273 = vadd.f32 %v1260, %v1272
    %v1274 = vpop.f32.mrf.mxu0
    %1275 = vdwg.mxu0
    %1276 = vmatpush.bf16.msra.mxu0 %v1168
    %1277 = vmatpush.bf16.msra.mxu0 %v1166
    %1278 = vmatpush.bf16.msra.mxu0 %v1164
    %1279 = vmatpush.bf16.msra.mxu0 %v1162
    %1280 = vmatpush.bf16.msra.mxu0 %v1160
    %1281 = vmatpush.bf16.msra.mxu0 %v1158
    %1282 = vmatpush.bf16.msra.mxu0 %v1156
    %1283 = vmatpush.bf16.msra.mxu0 %v1154
    %1284 = vmatmul.bf16.gmra.mxu0 %v923
    %v1285 = vpop.f32.mrf.mxu0
    %v1286 = vadd.f32 %v1273, %v1285
    %v1287 = vpop.f32.mrf.mxu0
    %1288 = vdwg.mxu0
    %1289 = vmatpush.bf16.msra.mxu0 %v1184
    %1290 = vmatpush.bf16.msra.mxu0 %v1182
    %1291 = vmatpush.bf16.msra.mxu0 %v1180
    %1292 = vmatpush.bf16.msra.mxu0 %v1178
    %1293 = vmatpush.bf16.msra.mxu0 %v1176
    %1294 = vmatpush.bf16.msra.mxu0 %v1174
    %1295 = vmatpush.bf16.msra.mxu0 %v1172
    %1296 = vmatpush.bf16.msra.mxu0 %v1170
    %1297 = vmatmul.bf16.gmra.mxu0 %v924
    %v1298 = vpop.f32.mrf.mxu0
    %v1299 = vadd.f32 %v1286, %v1298
    %v1300 = vpop.f32.mrf.mxu0
    %1301 = vdwg.mxu0
    %1302 = vmatpush.bf16.msra.mxu0 %v1137
    %1303 = vmatpush.bf16.msra.mxu0 %v1135
    %1304 = vmatpush.bf16.msra.mxu0 %v1133
    %1305 = vmatpush.bf16.msra.mxu0 %v1131
    %1306 = vmatpush.bf16.msra.mxu0 %v1129
    %1307 = vmatpush.bf16.msra.mxu0 %v1127
    %1308 = vmatpush.bf16.msra.mxu0 %v1125
    %1309 = vmatpush.bf16.msra.mxu0 %v1123
    %1310 = vmatmul.bf16.gmra.mxu0 %v921
    %v1311 = vpop.f32.mrf.mxu0
    %v1312 = vadd.f32 %v927, %v1311
    %v1313 = vpop.f32.mrf.mxu0
    %1314 = vdwg.mxu0
    %1315 = vmatpush.bf16.msra.mxu0 %v1153
    %1316 = vmatpush.bf16.msra.mxu0 %v1151
    %1317 = vmatpush.bf16.msra.mxu0 %v1149
    %1318 = vmatpush.bf16.msra.mxu0 %v1147
    %1319 = vmatpush.bf16.msra.mxu0 %v1145
    %1320 = vmatpush.bf16.msra.mxu0 %v1143
    %1321 = vmatpush.bf16.msra.mxu0 %v1141
    %1322 = vmatpush.bf16.msra.mxu0 %v1139
    %1323 = vmatmul.bf16.gmra.mxu0 %v922
    %v1324 = vpop.f32.mrf.mxu0
    %v1325 = vadd.f32 %v1312, %v1324
    %v1326 = vpop.f32.mrf.mxu0
    %1327 = vdwg.mxu0
    %1328 = vmatpush.bf16.msra.mxu0 %v1169
    %1329 = vmatpush.bf16.msra.mxu0 %v1167
    %1330 = vmatpush.bf16.msra.mxu0 %v1165
    %1331 = vmatpush.bf16.msra.mxu0 %v1163
    %1332 = vmatpush.bf16.msra.mxu0 %v1161
    %1333 = vmatpush.bf16.msra.mxu0 %v1159
    %1334 = vmatpush.bf16.msra.mxu0 %v1157
    %1335 = vmatpush.bf16.msra.mxu0 %v1155
    %1336 = vmatmul.bf16.gmra.mxu0 %v923
    %v1337 = vpop.f32.mrf.mxu0
    %v1338 = vadd.f32 %v1325, %v1337
    %v1339 = vpop.f32.mrf.mxu0
    %1340 = vdwg.mxu0
    %1341 = vmatpush.bf16.msra.mxu0 %v1185
    %1342 = vmatpush.bf16.msra.mxu0 %v1183
    %1343 = vmatpush.bf16.msra.mxu0 %v1181
    %1344 = vmatpush.bf16.msra.mxu0 %v1179
    %1345 = vmatpush.bf16.msra.mxu0 %v1177
    %1346 = vmatpush.bf16.msra.mxu0 %v1175
    %1347 = vmatpush.bf16.msra.mxu0 %v1173
    %1348 = vmatpush.bf16.msra.mxu0 %v1171
    %1349 = vmatmul.bf16.gmra.mxu0 %v924
    %v1350 = vpop.f32.mrf.mxu0
    %v1351 = vadd.f32 %v1338, %v1350
    %v1352 = vpop.f32.mrf.mxu0
    %1353 = vdwg.mxu0
    %v1354 = vxor.u32 %v1299, 2147483648
    %v1355 = vxor.u32 %v1351, 2147483648
    %v1356 = vmul.f32 %v1354, 1.442695
    %v1357 = vpow.pop %v1356
    %v1358 = vmul.f32 %v1355, 1.442695
    %v1359 = vpow.pop %v1358
    %v1360 = vadd.f32 %v1357, 1.0
    %v1361 = vadd.f32 %v1359, 1.0
    %v1362 = vrcp.pop %v1360
    %v1363 = vmul.f32 %v1360, %v1362
    %v1364 = vsub.f32 1.0, %v1363
    %v1365 = vmul.f32 %v1362, %v1364
    %v1366 = vadd.f32 %v1362, %v1365
    %vm1367 = vweird.f32 %v1360
    %vm1368 = vweird.f32 %v1362
    %vm1369 = vmor %vm1367, %vm1368
    %v1370 = vsel %vm1369, %v1362, %v1366
    %v1371 = vand.u32 2147483647, %v1360
    %vm1372 = vcmp.eq.f32.partialorder %v1371, 8.507059e+37
    %v1373 = vand.u32 %v1360, 2147483648
    %v1374 = vor.u32 1.1754944e-38, %v1373
    %v1375 = vsel %vm1372, %v1374, %v1370
    %v1376 = vmul.f32 1.0, %v1375
    %v1377 = vrcp.pop %v1361
    %v1378 = vmul.f32 %v1361, %v1377
    %v1379 = vsub.f32 1.0, %v1378
    %v1380 = vmul.f32 %v1377, %v1379
    %v1381 = vadd.f32 %v1377, %v1380
    %vm1382 = vweird.f32 %v1361
    %vm1383 = vweird.f32 %v1377
    %vm1384 = vmor %vm1382, %vm1383
    %v1385 = vsel %vm1384, %v1377, %v1381
    %v1386 = vand.u32 2147483647, %v1361
    %vm1387 = vcmp.eq.f32.partialorder %v1386, 8.507059e+37
    %v1388 = vand.u32 %v1361, 2147483648
    %v1389 = vor.u32 1.1754944e-38, %v1388
    %v1390 = vsel %vm1387, %v1389, %v1385
    %v1391 = vmul.f32 1.0, %v1390
    %v1392 = vmul.f32 %v1376, %v79
    %v1393 = vmul.f32 %v1391, %v80
    %v1394 = vpack.c.bf16 %v1392, %v1392
    %v1395 = vpack.c.bf16 %v1393, %v1393
    %v1397 = vperm.slane %v471, 0
    %v1398 = vperm.slane %v471, 1
    %v1399 = vperm.slane %v471, 2
    %v1400 = vperm.slane %v471, 3
    %v1469 = vunpack.c.l.b16 %v147
    %v1470 = vunpack.c.h.b16 %v147
    %v1471 = vunpack.c.l.b16 %v148
    %v1472 = vunpack.c.h.b16 %v148
    %v1473 = vunpack.c.l.b16 %v149
    %v1474 = vunpack.c.h.b16 %v149
    %v1475 = vunpack.c.l.b16 %v150
    %v1476 = vunpack.c.h.b16 %v150
    %v1477 = vunpack.c.l.b16 %v151
    %v1478 = vunpack.c.h.b16 %v151
    %v1479 = vunpack.c.l.b16 %v152
    %v1480 = vunpack.c.h.b16 %v152
    %v1481 = vunpack.c.l.b16 %v153
    %v1482 = vunpack.c.h.b16 %v153
    %v1483 = vunpack.c.l.b16 %v154
    %v1484 = vunpack.c.h.b16 %v154
    %v1485 = vunpack.c.l.b16 %v155
    %v1486 = vunpack.c.h.b16 %v155
    %v1487 = vunpack.c.l.b16 %v156
    %v1488 = vunpack.c.h.b16 %v156
    %v1489 = vunpack.c.l.b16 %v157
    %v1490 = vunpack.c.h.b16 %v157
    %v1491 = vunpack.c.l.b16 %v158
    %v1492 = vunpack.c.h.b16 %v158
    %v1493 = vunpack.c.l.b16 %v159
    %v1494 = vunpack.c.h.b16 %v159
    %v1495 = vunpack.c.l.b16 %v160
    %v1496 = vunpack.c.h.b16 %v160
    %v1497 = vunpack.c.l.b16 %v161
    %v1498 = vunpack.c.h.b16 %v161
    %v1499 = vunpack.c.l.b16 %v162
    %v1500 = vunpack.c.h.b16 %v162
    %v1501 = vunpack.c.l.b16 %v163
    %v1502 = vunpack.c.h.b16 %v163
    %v1503 = vunpack.c.l.b16 %v164
    %v1504 = vunpack.c.h.b16 %v164
    %v1505 = vunpack.c.l.b16 %v165
    %v1506 = vunpack.c.h.b16 %v165
    %v1507 = vunpack.c.l.b16 %v166
    %v1508 = vunpack.c.h.b16 %v166
    %v1509 = vunpack.c.l.b16 %v167
    %v1510 = vunpack.c.h.b16 %v167
    %v1511 = vunpack.c.l.b16 %v168
    %v1512 = vunpack.c.h.b16 %v168
    %v1513 = vunpack.c.l.b16 %v169
    %v1514 = vunpack.c.h.b16 %v169
    %v1515 = vunpack.c.l.b16 %v170
    %v1516 = vunpack.c.h.b16 %v170
    %v1517 = vunpack.c.l.b16 %v171
    %v1518 = vunpack.c.h.b16 %v171
    %v1519 = vunpack.c.l.b16 %v172
    %v1520 = vunpack.c.h.b16 %v172
    %v1521 = vunpack.c.l.b16 %v173
    %v1522 = vunpack.c.h.b16 %v173
    %v1523 = vunpack.c.l.b16 %v174
    %v1524 = vunpack.c.h.b16 %v174
    %v1525 = vunpack.c.l.b16 %v175
    %v1526 = vunpack.c.h.b16 %v175
    %v1527 = vunpack.c.l.b16 %v176
    %v1528 = vunpack.c.h.b16 %v176
    %v1529 = vunpack.c.l.b16 %v177
    %v1530 = vunpack.c.h.b16 %v177
    %v1531 = vunpack.c.l.b16 %v178
    %v1532 = vunpack.c.h.b16 %v178
    %v1533 = vunpack.c.l.b16 %v179
    %v1534 = vunpack.c.h.b16 %v179
    %v1535 = vunpack.c.l.b16 %v180
    %v1536 = vunpack.c.h.b16 %v180
    %v1537 = vunpack.c.l.b16 %v181
    %v1538 = vunpack.c.h.b16 %v181
    %v1539 = vunpack.c.l.b16 %v182
    %v1540 = vunpack.c.h.b16 %v182
    %v1541 = vunpack.c.l.b16 %v183
    %v1542 = vunpack.c.h.b16 %v183
    %v1543 = vunpack.c.l.b16 %v184
    %v1544 = vunpack.c.h.b16 %v184
    %v1545 = vunpack.c.l.b16 %v185
    %v1546 = vunpack.c.h.b16 %v185
    %v1547 = vunpack.c.l.b16 %v186
    %v1548 = vunpack.c.h.b16 %v186
    %v1549 = vunpack.c.l.b16 %v187
    %v1550 = vunpack.c.h.b16 %v187
    %v1551 = vunpack.c.l.b16 %v188
    %v1552 = vunpack.c.h.b16 %v188
    %v1553 = vunpack.c.l.b16 %v189
    %v1554 = vunpack.c.h.b16 %v189
    %v1555 = vunpack.c.l.b16 %v190
    %v1556 = vunpack.c.h.b16 %v190
    %v1557 = vunpack.c.l.b16 %v191
    %v1558 = vunpack.c.h.b16 %v191
    %v1559 = vunpack.c.l.b16 %v192
    %v1560 = vunpack.c.h.b16 %v192
    %v1561 = vunpack.c.l.b16 %v193
    %v1562 = vunpack.c.h.b16 %v193
    %v1563 = vunpack.c.l.b16 %v194
    %v1564 = vunpack.c.h.b16 %v194
    %v1565 = vunpack.c.l.b16 %v195
    %v1566 = vunpack.c.h.b16 %v195
    %v1567 = vunpack.c.l.b16 %v196
    %v1568 = vunpack.c.h.b16 %v196
    %v1569 = vunpack.c.l.b16 %v197
    %v1570 = vunpack.c.h.b16 %v197
    %v1571 = vunpack.c.l.b16 %v198
    %v1572 = vunpack.c.h.b16 %v198
    %v1573 = vunpack.c.l.b16 %v199
    %v1574 = vunpack.c.h.b16 %v199
    %v1575 = vunpack.c.l.b16 %v200
    %v1576 = vunpack.c.h.b16 %v200
    %v1577 = vunpack.c.l.b16 %v201
    %v1578 = vunpack.c.h.b16 %v201
    %v1579 = vunpack.c.l.b16 %v202
    %v1580 = vunpack.c.h.b16 %v202
    %v1581 = vunpack.c.l.b16 %v203
    %v1582 = vunpack.c.h.b16 %v203
    %v1583 = vunpack.c.l.b16 %v204
    %v1584 = vunpack.c.h.b16 %v204
    %v1585 = vunpack.c.l.b16 %v205
    %v1586 = vunpack.c.h.b16 %v205
    %v1587 = vunpack.c.l.b16 %v206
    %v1588 = vunpack.c.h.b16 %v206
    %v1589 = vunpack.c.l.b16 %v207
    %v1590 = vunpack.c.h.b16 %v207
    %v1591 = vunpack.c.l.b16 %v208
    %v1592 = vunpack.c.h.b16 %v208
    %v1593 = vunpack.c.l.b16 %v209
    %v1594 = vunpack.c.h.b16 %v209
    %v1595 = vunpack.c.l.b16 %v210
    %v1596 = vunpack.c.h.b16 %v210
    %v1597 = vpack.c.b16 %v1473, %v1469
    %v1598 = vpack.c.b16 %v1474, %v1470
    %v1599 = vpack.c.b16 %v1475, %v1471
    %v1600 = vpack.c.b16 %v1476, %v1472
    %v1601 = vpack.c.b16 %v1481, %v1477
    %v1602 = vpack.c.b16 %v1482, %v1478
    %v1603 = vpack.c.b16 %v1483, %v1479
    %v1604 = vpack.c.b16 %v1484, %v1480
    %v1605 = vpack.c.b16 %v1489, %v1485
    %v1606 = vpack.c.b16 %v1490, %v1486
    %v1607 = vpack.c.b16 %v1491, %v1487
    %v1608 = vpack.c.b16 %v1492, %v1488
    %v1609 = vpack.c.b16 %v1497, %v1493
    %v1610 = vpack.c.b16 %v1498, %v1494
    %v1611 = vpack.c.b16 %v1499, %v1495
    %v1612 = vpack.c.b16 %v1500, %v1496
    %v1613 = vpack.c.b16 %v1505, %v1501
    %v1614 = vpack.c.b16 %v1506, %v1502
    %v1615 = vpack.c.b16 %v1507, %v1503
    %v1616 = vpack.c.b16 %v1508, %v1504
    %v1617 = vpack.c.b16 %v1513, %v1509
    %v1618 = vpack.c.b16 %v1514, %v1510
    %v1619 = vpack.c.b16 %v1515, %v1511
    %v1620 = vpack.c.b16 %v1516, %v1512
    %v1621 = vpack.c.b16 %v1521, %v1517
    %v1622 = vpack.c.b16 %v1522, %v1518
    %v1623 = vpack.c.b16 %v1523, %v1519
    %v1624 = vpack.c.b16 %v1524, %v1520
    %v1625 = vpack.c.b16 %v1529, %v1525
    %v1626 = vpack.c.b16 %v1530, %v1526
    %v1627 = vpack.c.b16 %v1531, %v1527
    %v1628 = vpack.c.b16 %v1532, %v1528
    %v1629 = vpack.c.b16 %v1537, %v1533
    %v1630 = vpack.c.b16 %v1538, %v1534
    %v1631 = vpack.c.b16 %v1539, %v1535
    %v1632 = vpack.c.b16 %v1540, %v1536
    %v1633 = vpack.c.b16 %v1545, %v1541
    %v1634 = vpack.c.b16 %v1546, %v1542
    %v1635 = vpack.c.b16 %v1547, %v1543
    %v1636 = vpack.c.b16 %v1548, %v1544
    %v1637 = vpack.c.b16 %v1553, %v1549
    %v1638 = vpack.c.b16 %v1554, %v1550
    %v1639 = vpack.c.b16 %v1555, %v1551
    %v1640 = vpack.c.b16 %v1556, %v1552
    %v1641 = vpack.c.b16 %v1561, %v1557
    %v1642 = vpack.c.b16 %v1562, %v1558
    %v1643 = vpack.c.b16 %v1563, %v1559
    %v1644 = vpack.c.b16 %v1564, %v1560
    %v1645 = vpack.c.b16 %v1569, %v1565
    %v1646 = vpack.c.b16 %v1570, %v1566
    %v1647 = vpack.c.b16 %v1571, %v1567
    %v1648 = vpack.c.b16 %v1572, %v1568
    %v1649 = vpack.c.b16 %v1577, %v1573
    %v1650 = vpack.c.b16 %v1578, %v1574
    %v1651 = vpack.c.b16 %v1579, %v1575
    %v1652 = vpack.c.b16 %v1580, %v1576
    %v1653 = vpack.c.b16 %v1585, %v1581
    %v1654 = vpack.c.b16 %v1586, %v1582
    %v1655 = vpack.c.b16 %v1587, %v1583
    %v1656 = vpack.c.b16 %v1588, %v1584
    %v1657 = vpack.c.b16 %v1593, %v1589
    %v1658 = vpack.c.b16 %v1594, %v1590
    %v1659 = vpack.c.b16 %v1595, %v1591
    %v1660 = vpack.c.b16 %v1596, %v1592
    %1725 = vmatpush.bf16.msra.mxu0 %v1625
    %1726 = vmatpush.bf16.msra.mxu0 %v1621
    %1727 = vmatpush.bf16.msra.mxu0 %v1617
    %1728 = vmatpush.bf16.msra.mxu0 %v1613
    %1729 = vmatpush.bf16.msra.mxu0 %v1609
    %1730 = vmatpush.bf16.msra.mxu0 %v1605
    %1731 = vmatpush.bf16.msra.mxu0 %v1601
    %1732 = vmatpush.bf16.msra.mxu0 %v1597
    %1733 = vmatmul.bf16.gmra.mxu0 %v1394
    %v1734 = vpop.f32.mrf.mxu0
    %v1735 = vadd.f32 %v1397, %v1734
    %v1736 = vpop.f32.mrf.mxu0
    %1737 = vdwg.mxu0
    %1738 = vmatpush.bf16.msra.mxu0 %v1657
    %1739 = vmatpush.bf16.msra.mxu0 %v1653
    %1740 = vmatpush.bf16.msra.mxu0 %v1649
    %1741 = vmatpush.bf16.msra.mxu0 %v1645
    %1742 = vmatpush.bf16.msra.mxu0 %v1641
    %1743 = vmatpush.bf16.msra.mxu0 %v1637
    %1744 = vmatpush.bf16.msra.mxu0 %v1633
    %1745 = vmatpush.bf16.msra.mxu0 %v1629
    %1746 = vmatmul.bf16.gmra.mxu0 %v1395
    %v1747 = vpop.f32.mrf.mxu0
    %v1748 = vadd.f32 %v1735, %v1747
    %v1749 = vpop.f32.mrf.mxu0
    %1750 = vdwg.mxu0
    %1751 = vmatpush.bf16.msra.mxu0 %v1626
    %1752 = vmatpush.bf16.msra.mxu0 %v1622
    %1753 = vmatpush.bf16.msra.mxu0 %v1618
    %1754 = vmatpush.bf16.msra.mxu0 %v1614
    %1755 = vmatpush.bf16.msra.mxu0 %v1610
    %1756 = vmatpush.bf16.msra.mxu0 %v1606
    %1757 = vmatpush.bf16.msra.mxu0 %v1602
    %1758 = vmatpush.bf16.msra.mxu0 %v1598
    %1759 = vmatmul.bf16.gmra.mxu0 %v1394
    %v1760 = vpop.f32.mrf.mxu0
    %v1761 = vadd.f32 %v1398, %v1760
    %v1762 = vpop.f32.mrf.mxu0
    %1763 = vdwg.mxu0
    %1764 = vmatpush.bf16.msra.mxu0 %v1658
    %1765 = vmatpush.bf16.msra.mxu0 %v1654
    %1766 = vmatpush.bf16.msra.mxu0 %v1650
    %1767 = vmatpush.bf16.msra.mxu0 %v1646
    %1768 = vmatpush.bf16.msra.mxu0 %v1642
    %1769 = vmatpush.bf16.msra.mxu0 %v1638
    %1770 = vmatpush.bf16.msra.mxu0 %v1634
    %1771 = vmatpush.bf16.msra.mxu0 %v1630
    %1772 = vmatmul.bf16.gmra.mxu0 %v1395
    %v1773 = vpop.f32.mrf.mxu0
    %v1774 = vadd.f32 %v1761, %v1773
    %v1775 = vpop.f32.mrf.mxu0
    %1776 = vdwg.mxu0
    %1777 = vmatpush.bf16.msra.mxu0 %v1627
    %1778 = vmatpush.bf16.msra.mxu0 %v1623
    %1779 = vmatpush.bf16.msra.mxu0 %v1619
    %1780 = vmatpush.bf16.msra.mxu0 %v1615
    %1781 = vmatpush.bf16.msra.mxu0 %v1611
    %1782 = vmatpush.bf16.msra.mxu0 %v1607
    %1783 = vmatpush.bf16.msra.mxu0 %v1603
    %1784 = vmatpush.bf16.msra.mxu0 %v1599
    %1785 = vmatmul.bf16.gmra.mxu0 %v1394
    %v1786 = vpop.f32.mrf.mxu0
    %v1787 = vadd.f32 %v1399, %v1786
    %v1788 = vpop.f32.mrf.mxu0
    %1789 = vdwg.mxu0
    %1790 = vmatpush.bf16.msra.mxu0 %v1659
    %1791 = vmatpush.bf16.msra.mxu0 %v1655
    %1792 = vmatpush.bf16.msra.mxu0 %v1651
    %1793 = vmatpush.bf16.msra.mxu0 %v1647
    %1794 = vmatpush.bf16.msra.mxu0 %v1643
    %1795 = vmatpush.bf16.msra.mxu0 %v1639
    %1796 = vmatpush.bf16.msra.mxu0 %v1635
    %1797 = vmatpush.bf16.msra.mxu0 %v1631
    %1798 = vmatmul.bf16.gmra.mxu0 %v1395
    %v1799 = vpop.f32.mrf.mxu0
    %v1800 = vadd.f32 %v1787, %v1799
    %v1801 = vpop.f32.mrf.mxu0
    %1802 = vdwg.mxu0
    %1803 = vmatpush.bf16.msra.mxu0 %v1628
    %1804 = vmatpush.bf16.msra.mxu0 %v1624
    %1805 = vmatpush.bf16.msra.mxu0 %v1620
    %1806 = vmatpush.bf16.msra.mxu0 %v1616
    %1807 = vmatpush.bf16.msra.mxu0 %v1612
    %1808 = vmatpush.bf16.msra.mxu0 %v1608
    %1809 = vmatpush.bf16.msra.mxu0 %v1604
    %1810 = vmatpush.bf16.msra.mxu0 %v1600
    %1811 = vmatmul.bf16.gmra.mxu0 %v1394
    %v1812 = vpop.f32.mrf.mxu0
    %v1813 = vadd.f32 %v1400, %v1812
    %v1814 = vpop.f32.mrf.mxu0
    %1815 = vdwg.mxu0
    %1816 = vmatpush.bf16.msra.mxu0 %v1660
    %1817 = vmatpush.bf16.msra.mxu0 %v1656
    %1818 = vmatpush.bf16.msra.mxu0 %v1652
    %1819 = vmatpush.bf16.msra.mxu0 %v1648
    %1820 = vmatpush.bf16.msra.mxu0 %v1644
    %1821 = vmatpush.bf16.msra.mxu0 %v1640
    %1822 = vmatpush.bf16.msra.mxu0 %v1636
    %1823 = vmatpush.bf16.msra.mxu0 %v1632
    %1824 = vmatmul.bf16.gmra.mxu0 %v1395
    %v1825 = vpop.f32.mrf.mxu0
    %v1826 = vadd.f32 %v1813, %v1825
    %v1827 = vpop.f32.mrf.mxu0
    %1828 = vdwg.mxu0
    %v1829 = vmax.f32 %v1748, 0.0
    %v1830 = vmax.f32 %v1774, 0.0
    %v1831 = vmax.f32 %v1800, 0.0
    %v1832 = vmax.f32 %v1826, 0.0
    %v1834 = vperm.slane %v473, 0
    %v1835 = vperm.slane %v473, 1
    %v1836 = vperm.slane %v473, 2
    %v1837 = vperm.slane %v473, 3
    %v1842 = vmul.f32 %v1829, %v1834
    %v1843 = vmul.f32 %v1830, %v1835
    %v1844 = vmul.f32 %v1831, %v1836
    %v1845 = vmul.f32 %v1832, %v1837
    %v1847 = vperm.slane %v475, 0
    %v1848 = vperm.slane %v475, 1
    %v1849 = vperm.slane %v475, 2
    %v1850 = vperm.slane %v475, 3
    %v1855 = vadd.f32 %v1842, %v1847
    %v1856 = vadd.f32 %v1843, %v1848
    %v1857 = vadd.f32 %v1844, %v1849
    %v1858 = vadd.f32 %v1845, %v1850
    %v1859 = vpack.c.bf16 %v1855, %v1855
    %v1860 = vpack.c.bf16 %v1856, %v1856
    %v1861 = vpack.c.bf16 %v1857, %v1857
    %v1862 = vpack.c.bf16 %v1858, %v1858
    %v1864 = vperm.slane %v477, 0
    %v1865 = vperm.slane %v477, 1
    %v1866 = vperm.slane %v477, 2
    %v1867 = vperm.slane %v477, 3
    %v2000 = vunpack.c.l.b16 %v275
    %v2001 = vunpack.c.h.b16 %v275
    %v2002 = vunpack.c.l.b16 %v276
    %v2003 = vunpack.c.h.b16 %v276
    %v2004 = vunpack.c.l.b16 %v277
    %v2005 = vunpack.c.h.b16 %v277
    %v2006 = vunpack.c.l.b16 %v278
    %v2007 = vunpack.c.h.b16 %v278
    %v2008 = vunpack.c.l.b16 %v279
    %v2009 = vunpack.c.h.b16 %v279
    %v2010 = vunpack.c.l.b16 %v280
    %v2011 = vunpack.c.h.b16 %v280
    %v2012 = vunpack.c.l.b16 %v281
    %v2013 = vunpack.c.h.b16 %v281
    %v2014 = vunpack.c.l.b16 %v282
    %v2015 = vunpack.c.h.b16 %v282
    %v2016 = vunpack.c.l.b16 %v283
    %v2017 = vunpack.c.h.b16 %v283
    %v2018 = vunpack.c.l.b16 %v284
    %v2019 = vunpack.c.h.b16 %v284
    %v2020 = vunpack.c.l.b16 %v285
    %v2021 = vunpack.c.h.b16 %v285
    %v2022 = vunpack.c.l.b16 %v286
    %v2023 = vunpack.c.h.b16 %v286
    %v2024 = vunpack.c.l.b16 %v287
    %v2025 = vunpack.c.h.b16 %v287
    %v2026 = vunpack.c.l.b16 %v288
    %v2027 = vunpack.c.h.b16 %v288
    %v2028 = vunpack.c.l.b16 %v289
    %v2029 = vunpack.c.h.b16 %v289
    %v2030 = vunpack.c.l.b16 %v290
    %v2031 = vunpack.c.h.b16 %v290
    %v2032 = vunpack.c.l.b16 %v291
    %v2033 = vunpack.c.h.b16 %v291
    %v2034 = vunpack.c.l.b16 %v292
    %v2035 = vunpack.c.h.b16 %v292
    %v2036 = vunpack.c.l.b16 %v293
    %v2037 = vunpack.c.h.b16 %v293
    %v2038 = vunpack.c.l.b16 %v294
    %v2039 = vunpack.c.h.b16 %v294
    %v2040 = vunpack.c.l.b16 %v295
    %v2041 = vunpack.c.h.b16 %v295
    %v2042 = vunpack.c.l.b16 %v296
    %v2043 = vunpack.c.h.b16 %v296
    %v2044 = vunpack.c.l.b16 %v297
    %v2045 = vunpack.c.h.b16 %v297
    %v2046 = vunpack.c.l.b16 %v298
    %v2047 = vunpack.c.h.b16 %v298
    %v2048 = vunpack.c.l.b16 %v299
    %v2049 = vunpack.c.h.b16 %v299
    %v2050 = vunpack.c.l.b16 %v300
    %v2051 = vunpack.c.h.b16 %v300
    %v2052 = vunpack.c.l.b16 %v301
    %v2053 = vunpack.c.h.b16 %v301
    %v2054 = vunpack.c.l.b16 %v302
    %v2055 = vunpack.c.h.b16 %v302
    %v2056 = vunpack.c.l.b16 %v303
    %v2057 = vunpack.c.h.b16 %v303
    %v2058 = vunpack.c.l.b16 %v304
    %v2059 = vunpack.c.h.b16 %v304
    %v2060 = vunpack.c.l.b16 %v305
    %v2061 = vunpack.c.h.b16 %v305
    %v2062 = vunpack.c.l.b16 %v306
    %v2063 = vunpack.c.h.b16 %v306
    %v2064 = vunpack.c.l.b16 %v307
    %v2065 = vunpack.c.h.b16 %v307
    %v2066 = vunpack.c.l.b16 %v308
    %v2067 = vunpack.c.h.b16 %v308
    %v2068 = vunpack.c.l.b16 %v309
    %v2069 = vunpack.c.h.b16 %v309
    %v2070 = vunpack.c.l.b16 %v310
    %v2071 = vunpack.c.h.b16 %v310
    %v2072 = vunpack.c.l.b16 %v311
    %v2073 = vunpack.c.h.b16 %v311
    %v2074 = vunpack.c.l.b16 %v312
    %v2075 = vunpack.c.h.b16 %v312
    %v2076 = vunpack.c.l.b16 %v313
    %v2077 = vunpack.c.h.b16 %v313
    %v2078 = vunpack.c.l.b16 %v314
    %v2079 = vunpack.c.h.b16 %v314
    %v2080 = vunpack.c.l.b16 %v315
    %v2081 = vunpack.c.h.b16 %v315
    %v2082 = vunpack.c.l.b16 %v316
    %v2083 = vunpack.c.h.b16 %v316
    %v2084 = vunpack.c.l.b16 %v317
    %v2085 = vunpack.c.h.b16 %v317
    %v2086 = vunpack.c.l.b16 %v318
    %v2087 = vunpack.c.h.b16 %v318
    %v2088 = vunpack.c.l.b16 %v319
    %v2089 = vunpack.c.h.b16 %v319
    %v2090 = vunpack.c.l.b16 %v320
    %v2091 = vunpack.c.h.b16 %v320
    %v2092 = vunpack.c.l.b16 %v321
    %v2093 = vunpack.c.h.b16 %v321
    %v2094 = vunpack.c.l.b16 %v322
    %v2095 = vunpack.c.h.b16 %v322
    %v2096 = vunpack.c.l.b16 %v323
    %v2097 = vunpack.c.h.b16 %v323
    %v2098 = vunpack.c.l.b16 %v324
    %v2099 = vunpack.c.h.b16 %v324
    %v2100 = vunpack.c.l.b16 %v325
    %v2101 = vunpack.c.h.b16 %v325
    %v2102 = vunpack.c.l.b16 %v326
    %v2103 = vunpack.c.h.b16 %v326
    %v2104 = vunpack.c.l.b16 %v327
    %v2105 = vunpack.c.h.b16 %v327
    %v2106 = vunpack.c.l.b16 %v328
    %v2107 = vunpack.c.h.b16 %v328
    %v2108 = vunpack.c.l.b16 %v329
    %v2109 = vunpack.c.h.b16 %v329
    %v2110 = vunpack.c.l.b16 %v330
    %v2111 = vunpack.c.h.b16 %v330
    %v2112 = vunpack.c.l.b16 %v331
    %v2113 = vunpack.c.h.b16 %v331
    %v2114 = vunpack.c.l.b16 %v332
    %v2115 = vunpack.c.h.b16 %v332
    %v2116 = vunpack.c.l.b16 %v333
    %v2117 = vunpack.c.h.b16 %v333
    %v2118 = vunpack.c.l.b16 %v334
    %v2119 = vunpack.c.h.b16 %v334
    %v2120 = vunpack.c.l.b16 %v335
    %v2121 = vunpack.c.h.b16 %v335
    %v2122 = vunpack.c.l.b16 %v336
    %v2123 = vunpack.c.h.b16 %v336
    %v2124 = vunpack.c.l.b16 %v337
    %v2125 = vunpack.c.h.b16 %v337
    %v2126 = vunpack.c.l.b16 %v338
    %v2127 = vunpack.c.h.b16 %v338
    %v2128 = vunpack.c.l.b16 %v339
    %v2129 = vunpack.c.h.b16 %v339
    %v2130 = vunpack.c.l.b16 %v340
    %v2131 = vunpack.c.h.b16 %v340
    %v2132 = vunpack.c.l.b16 %v341
    %v2133 = vunpack.c.h.b16 %v341
    %v2134 = vunpack.c.l.b16 %v342
    %v2135 = vunpack.c.h.b16 %v342
    %v2136 = vunpack.c.l.b16 %v343
    %v2137 = vunpack.c.h.b16 %v343
    %v2138 = vunpack.c.l.b16 %v344
    %v2139 = vunpack.c.h.b16 %v344
    %v2140 = vunpack.c.l.b16 %v345
    %v2141 = vunpack.c.h.b16 %v345
    %v2142 = vunpack.c.l.b16 %v346
    %v2143 = vunpack.c.h.b16 %v346
    %v2144 = vunpack.c.l.b16 %v347
    %v2145 = vunpack.c.h.b16 %v347
    %v2146 = vunpack.c.l.b16 %v348
    %v2147 = vunpack.c.h.b16 %v348
    %v2148 = vunpack.c.l.b16 %v349
    %v2149 = vunpack.c.h.b16 %v349
    %v2150 = vunpack.c.l.b16 %v350
    %v2151 = vunpack.c.h.b16 %v350
    %v2152 = vunpack.c.l.b16 %v351
    %v2153 = vunpack.c.h.b16 %v351
    %v2154 = vunpack.c.l.b16 %v352
    %v2155 = vunpack.c.h.b16 %v352
    %v2156 = vunpack.c.l.b16 %v353
    %v2157 = vunpack.c.h.b16 %v353
    %v2158 = vunpack.c.l.b16 %v354
    %v2159 = vunpack.c.h.b16 %v354
    %v2160 = vunpack.c.l.b16 %v355
    %v2161 = vunpack.c.h.b16 %v355
    %v2162 = vunpack.c.l.b16 %v356
    %v2163 = vunpack.c.h.b16 %v356
    %v2164 = vunpack.c.l.b16 %v357
    %v2165 = vunpack.c.h.b16 %v357
    %v2166 = vunpack.c.l.b16 %v358
    %v2167 = vunpack.c.h.b16 %v358
    %v2168 = vunpack.c.l.b16 %v359
    %v2169 = vunpack.c.h.b16 %v359
    %v2170 = vunpack.c.l.b16 %v360
    %v2171 = vunpack.c.h.b16 %v360
    %v2172 = vunpack.c.l.b16 %v361
    %v2173 = vunpack.c.h.b16 %v361
    %v2174 = vunpack.c.l.b16 %v362
    %v2175 = vunpack.c.h.b16 %v362
    %v2176 = vunpack.c.l.b16 %v363
    %v2177 = vunpack.c.h.b16 %v363
    %v2178 = vunpack.c.l.b16 %v364
    %v2179 = vunpack.c.h.b16 %v364
    %v2180 = vunpack.c.l.b16 %v365
    %v2181 = vunpack.c.h.b16 %v365
    %v2182 = vunpack.c.l.b16 %v366
    %v2183 = vunpack.c.h.b16 %v366
    %v2184 = vunpack.c.l.b16 %v367
    %v2185 = vunpack.c.h.b16 %v367
    %v2186 = vunpack.c.l.b16 %v368
    %v2187 = vunpack.c.h.b16 %v368
    %v2188 = vunpack.c.l.b16 %v369
    %v2189 = vunpack.c.h.b16 %v369
    %v2190 = vunpack.c.l.b16 %v370
    %v2191 = vunpack.c.h.b16 %v370
    %v2192 = vunpack.c.l.b16 %v371
    %v2193 = vunpack.c.h.b16 %v371
    %v2194 = vunpack.c.l.b16 %v372
    %v2195 = vunpack.c.h.b16 %v372
    %v2196 = vunpack.c.l.b16 %v373
    %v2197 = vunpack.c.h.b16 %v373
    %v2198 = vunpack.c.l.b16 %v374
    %v2199 = vunpack.c.h.b16 %v374
    %v2200 = vunpack.c.l.b16 %v375
    %v2201 = vunpack.c.h.b16 %v375
    %v2202 = vunpack.c.l.b16 %v376
    %v2203 = vunpack.c.h.b16 %v376
    %v2204 = vunpack.c.l.b16 %v377
    %v2205 = vunpack.c.h.b16 %v377
    %v2206 = vunpack.c.l.b16 %v378
    %v2207 = vunpack.c.h.b16 %v378
    %v2208 = vunpack.c.l.b16 %v379
    %v2209 = vunpack.c.h.b16 %v379
    %v2210 = vunpack.c.l.b16 %v380
    %v2211 = vunpack.c.h.b16 %v380
    %v2212 = vunpack.c.l.b16 %v381
    %v2213 = vunpack.c.h.b16 %v381
    %v2214 = vunpack.c.l.b16 %v382
    %v2215 = vunpack.c.h.b16 %v382
    %v2216 = vunpack.c.l.b16 %v383
    %v2217 = vunpack.c.h.b16 %v383
    %v2218 = vunpack.c.l.b16 %v384
    %v2219 = vunpack.c.h.b16 %v384
    %v2220 = vunpack.c.l.b16 %v385
    %v2221 = vunpack.c.h.b16 %v385
    %v2222 = vunpack.c.l.b16 %v386
    %v2223 = vunpack.c.h.b16 %v386
    %v2224 = vunpack.c.l.b16 %v387
    %v2225 = vunpack.c.h.b16 %v387
    %v2226 = vunpack.c.l.b16 %v388
    %v2227 = vunpack.c.h.b16 %v388
    %v2228 = vunpack.c.l.b16 %v389
    %v2229 = vunpack.c.h.b16 %v389
    %v2230 = vunpack.c.l.b16 %v390
    %v2231 = vunpack.c.h.b16 %v390
    %v2232 = vunpack.c.l.b16 %v391
    %v2233 = vunpack.c.h.b16 %v391
    %v2234 = vunpack.c.l.b16 %v392
    %v2235 = vunpack.c.h.b16 %v392
    %v2236 = vunpack.c.l.b16 %v393
    %v2237 = vunpack.c.h.b16 %v393
    %v2238 = vunpack.c.l.b16 %v394
    %v2239 = vunpack.c.h.b16 %v394
    %v2240 = vunpack.c.l.b16 %v395
    %v2241 = vunpack.c.h.b16 %v395
    %v2242 = vunpack.c.l.b16 %v396
    %v2243 = vunpack.c.h.b16 %v396
    %v2244 = vunpack.c.l.b16 %v397
    %v2245 = vunpack.c.h.b16 %v397
    %v2246 = vunpack.c.l.b16 %v398
    %v2247 = vunpack.c.h.b16 %v398
    %v2248 = vunpack.c.l.b16 %v399
    %v2249 = vunpack.c.h.b16 %v399
    %v2250 = vunpack.c.l.b16 %v400
    %v2251 = vunpack.c.h.b16 %v400
    %v2252 = vunpack.c.l.b16 %v401
    %v2253 = vunpack.c.h.b16 %v401
    %v2254 = vunpack.c.l.b16 %v402
    %v2255 = vunpack.c.h.b16 %v402
    %v2256 = vpack.c.b16 %v2004, %v2000
    %v2257 = vpack.c.b16 %v2005, %v2001
    %v2258 = vpack.c.b16 %v2006, %v2002
    %v2259 = vpack.c.b16 %v2007, %v2003
    %v2260 = vpack.c.b16 %v2012, %v2008
    %v2261 = vpack.c.b16 %v2013, %v2009
    %v2262 = vpack.c.b16 %v2014, %v2010
    %v2263 = vpack.c.b16 %v2015, %v2011
    %v2264 = vpack.c.b16 %v2020, %v2016
    %v2265 = vpack.c.b16 %v2021, %v2017
    %v2266 = vpack.c.b16 %v2022, %v2018
    %v2267 = vpack.c.b16 %v2023, %v2019
    %v2268 = vpack.c.b16 %v2028, %v2024
    %v2269 = vpack.c.b16 %v2029, %v2025
    %v2270 = vpack.c.b16 %v2030, %v2026
    %v2271 = vpack.c.b16 %v2031, %v2027
    %v2272 = vpack.c.b16 %v2036, %v2032
    %v2273 = vpack.c.b16 %v2037, %v2033
    %v2274 = vpack.c.b16 %v2038, %v2034
    %v2275 = vpack.c.b16 %v2039, %v2035
    %v2276 = vpack.c.b16 %v2044, %v2040
    %v2277 = vpack.c.b16 %v2045, %v2041
    %v2278 = vpack.c.b16 %v2046, %v2042
    %v2279 = vpack.c.b16 %v2047, %v2043
    %v2280 = vpack.c.b16 %v2052, %v2048
    %v2281 = vpack.c.b16 %v2053, %v2049
    %v2282 = vpack.c.b16 %v2054, %v2050
    %v2283 = vpack.c.b16 %v2055, %v2051
    %v2284 = vpack.c.b16 %v2060, %v2056
    %v2285 = vpack.c.b16 %v2061, %v2057
    %v2286 = vpack.c.b16 %v2062, %v2058
    %v2287 = vpack.c.b16 %v2063, %v2059
    %v2288 = vpack.c.b16 %v2068, %v2064
    %v2289 = vpack.c.b16 %v2069, %v2065
    %v2290 = vpack.c.b16 %v2070, %v2066
    %v2291 = vpack.c.b16 %v2071, %v2067
    %v2292 = vpack.c.b16 %v2076, %v2072
    %v2293 = vpack.c.b16 %v2077, %v2073
    %v2294 = vpack.c.b16 %v2078, %v2074
    %v2295 = vpack.c.b16 %v2079, %v2075
    %v2296 = vpack.c.b16 %v2084, %v2080
    %v2297 = vpack.c.b16 %v2085, %v2081
    %v2298 = vpack.c.b16 %v2086, %v2082
    %v2299 = vpack.c.b16 %v2087, %v2083
    %v2300 = vpack.c.b16 %v2092, %v2088
    %v2301 = vpack.c.b16 %v2093, %v2089
    %v2302 = vpack.c.b16 %v2094, %v2090
    %v2303 = vpack.c.b16 %v2095, %v2091
    %v2304 = vpack.c.b16 %v2100, %v2096
    %v2305 = vpack.c.b16 %v2101, %v2097
    %v2306 = vpack.c.b16 %v2102, %v2098
    %v2307 = vpack.c.b16 %v2103, %v2099
    %v2308 = vpack.c.b16 %v2108, %v2104
    %v2309 = vpack.c.b16 %v2109, %v2105
    %v2310 = vpack.c.b16 %v2110, %v2106
    %v2311 = vpack.c.b16 %v2111, %v2107
    %v2312 = vpack.c.b16 %v2116, %v2112
    %v2313 = vpack.c.b16 %v2117, %v2113
    %v2314 = vpack.c.b16 %v2118, %v2114
    %v2315 = vpack.c.b16 %v2119, %v2115
    %v2316 = vpack.c.b16 %v2124, %v2120
    %v2317 = vpack.c.b16 %v2125, %v2121
    %v2318 = vpack.c.b16 %v2126, %v2122
    %v2319 = vpack.c.b16 %v2127, %v2123
    %v2320 = vpack.c.b16 %v2132, %v2128
    %v2321 = vpack.c.b16 %v2133, %v2129
    %v2322 = vpack.c.b16 %v2134, %v2130
    %v2323 = vpack.c.b16 %v2135, %v2131
    %v2324 = vpack.c.b16 %v2140, %v2136
    %v2325 = vpack.c.b16 %v2141, %v2137
    %v2326 = vpack.c.b16 %v2142, %v2138
    %v2327 = vpack.c.b16 %v2143, %v2139
    %v2328 = vpack.c.b16 %v2148, %v2144
    %v2329 = vpack.c.b16 %v2149, %v2145
    %v2330 = vpack.c.b16 %v2150, %v2146
    %v2331 = vpack.c.b16 %v2151, %v2147
    %v2332 = vpack.c.b16 %v2156, %v2152
    %v2333 = vpack.c.b16 %v2157, %v2153
    %v2334 = vpack.c.b16 %v2158, %v2154
    %v2335 = vpack.c.b16 %v2159, %v2155
    %v2336 = vpack.c.b16 %v2164, %v2160
    %v2337 = vpack.c.b16 %v2165, %v2161
    %v2338 = vpack.c.b16 %v2166, %v2162
    %v2339 = vpack.c.b16 %v2167, %v2163
    %v2340 = vpack.c.b16 %v2172, %v2168
    %v2341 = vpack.c.b16 %v2173, %v2169
    %v2342 = vpack.c.b16 %v2174, %v2170
    %v2343 = vpack.c.b16 %v2175, %v2171
    %v2344 = vpack.c.b16 %v2180, %v2176
    %v2345 = vpack.c.b16 %v2181, %v2177
    %v2346 = vpack.c.b16 %v2182, %v2178
    %v2347 = vpack.c.b16 %v2183, %v2179
    %v2348 = vpack.c.b16 %v2188, %v2184
    %v2349 = vpack.c.b16 %v2189, %v2185
    %v2350 = vpack.c.b16 %v2190, %v2186
    %v2351 = vpack.c.b16 %v2191, %v2187
    %v2352 = vpack.c.b16 %v2196, %v2192
    %v2353 = vpack.c.b16 %v2197, %v2193
    %v2354 = vpack.c.b16 %v2198, %v2194
    %v2355 = vpack.c.b16 %v2199, %v2195
    %v2356 = vpack.c.b16 %v2204, %v2200
    %v2357 = vpack.c.b16 %v2205, %v2201
    %v2358 = vpack.c.b16 %v2206, %v2202
    %v2359 = vpack.c.b16 %v2207, %v2203
    %v2360 = vpack.c.b16 %v2212, %v2208
    %v2361 = vpack.c.b16 %v2213, %v2209
    %v2362 = vpack.c.b16 %v2214, %v2210
    %v2363 = vpack.c.b16 %v2215, %v2211
    %v2364 = vpack.c.b16 %v2220, %v2216
    %v2365 = vpack.c.b16 %v2221, %v2217
    %v2366 = vpack.c.b16 %v2222, %v2218
    %v2367 = vpack.c.b16 %v2223, %v2219
    %v2368 = vpack.c.b16 %v2228, %v2224
    %v2369 = vpack.c.b16 %v2229, %v2225
    %v2370 = vpack.c.b16 %v2230, %v2226
    %v2371 = vpack.c.b16 %v2231, %v2227
    %v2372 = vpack.c.b16 %v2236, %v2232
    %v2373 = vpack.c.b16 %v2237, %v2233
    %v2374 = vpack.c.b16 %v2238, %v2234
    %v2375 = vpack.c.b16 %v2239, %v2235
    %v2376 = vpack.c.b16 %v2244, %v2240
    %v2377 = vpack.c.b16 %v2245, %v2241
    %v2378 = vpack.c.b16 %v2246, %v2242
    %v2379 = vpack.c.b16 %v2247, %v2243
    %v2380 = vpack.c.b16 %v2252, %v2248
    %v2381 = vpack.c.b16 %v2253, %v2249
    %v2382 = vpack.c.b16 %v2254, %v2250
    %v2383 = vpack.c.b16 %v2255, %v2251
    %2512 = vmatpush.bf16.msra.mxu0 %v2284
    %2513 = vmatpush.bf16.msra.mxu0 %v2280
    %2514 = vmatpush.bf16.msra.mxu0 %v2276
    %2515 = vmatpush.bf16.msra.mxu0 %v2272
    %2516 = vmatpush.bf16.msra.mxu0 %v2268
    %2517 = vmatpush.bf16.msra.mxu0 %v2264
    %2518 = vmatpush.bf16.msra.mxu0 %v2260
    %2519 = vmatpush.bf16.msra.mxu0 %v2256
    %2520 = vmatmul.bf16.gmra.mxu0 %v1859
    %v2521 = vpop.f32.mrf.mxu0
    %v2522 = vadd.f32 %v1864, %v2521
    %v2523 = vpop.f32.mrf.mxu0
    %2524 = vdwg.mxu0
    %2525 = vmatpush.bf16.msra.mxu0 %v2316
    %2526 = vmatpush.bf16.msra.mxu0 %v2312
    %2527 = vmatpush.bf16.msra.mxu0 %v2308
    %2528 = vmatpush.bf16.msra.mxu0 %v2304
    %2529 = vmatpush.bf16.msra.mxu0 %v2300
    %2530 = vmatpush.bf16.msra.mxu0 %v2296
    %2531 = vmatpush.bf16.msra.mxu0 %v2292
    %2532 = vmatpush.bf16.msra.mxu0 %v2288
    %2533 = vmatmul.bf16.gmra.mxu0 %v1860
    %v2534 = vpop.f32.mrf.mxu0
    %v2535 = vadd.f32 %v2522, %v2534
    %v2536 = vpop.f32.mrf.mxu0
    %2537 = vdwg.mxu0
    %2538 = vmatpush.bf16.msra.mxu0 %v2348
    %2539 = vmatpush.bf16.msra.mxu0 %v2344
    %2540 = vmatpush.bf16.msra.mxu0 %v2340
    %2541 = vmatpush.bf16.msra.mxu0 %v2336
    %2542 = vmatpush.bf16.msra.mxu0 %v2332
    %2543 = vmatpush.bf16.msra.mxu0 %v2328
    %2544 = vmatpush.bf16.msra.mxu0 %v2324
    %2545 = vmatpush.bf16.msra.mxu0 %v2320
    %2546 = vmatmul.bf16.gmra.mxu0 %v1861
    %v2547 = vpop.f32.mrf.mxu0
    %v2548 = vadd.f32 %v2535, %v2547
    %v2549 = vpop.f32.mrf.mxu0
    %2550 = vdwg.mxu0
    %2551 = vmatpush.bf16.msra.mxu0 %v2380
    %2552 = vmatpush.bf16.msra.mxu0 %v2376
    %2553 = vmatpush.bf16.msra.mxu0 %v2372
    %2554 = vmatpush.bf16.msra.mxu0 %v2368
    %2555 = vmatpush.bf16.msra.mxu0 %v2364
    %2556 = vmatpush.bf16.msra.mxu0 %v2360
    %2557 = vmatpush.bf16.msra.mxu0 %v2356
    %2558 = vmatpush.bf16.msra.mxu0 %v2352
    %2559 = vmatmul.bf16.gmra.mxu0 %v1862
    %v2560 = vpop.f32.mrf.mxu0
    %v2561 = vadd.f32 %v2548, %v2560
    %v2562 = vpop.f32.mrf.mxu0
    %2563 = vdwg.mxu0
    %2564 = vmatpush.bf16.msra.mxu0 %v2285
    %2565 = vmatpush.bf16.msra.mxu0 %v2281
    %2566 = vmatpush.bf16.msra.mxu0 %v2277
    %2567 = vmatpush.bf16.msra.mxu0 %v2273
    %2568 = vmatpush.bf16.msra.mxu0 %v2269
    %2569 = vmatpush.bf16.msra.mxu0 %v2265
    %2570 = vmatpush.bf16.msra.mxu0 %v2261
    %2571 = vmatpush.bf16.msra.mxu0 %v2257
    %2572 = vmatmul.bf16.gmra.mxu0 %v1859
    %v2573 = vpop.f32.mrf.mxu0
    %v2574 = vadd.f32 %v1865, %v2573
    %v2575 = vpop.f32.mrf.mxu0
    %2576 = vdwg.mxu0
    %2577 = vmatpush.bf16.msra.mxu0 %v2317
    %2578 = vmatpush.bf16.msra.mxu0 %v2313
    %2579 = vmatpush.bf16.msra.mxu0 %v2309
    %2580 = vmatpush.bf16.msra.mxu0 %v2305
    %2581 = vmatpush.bf16.msra.mxu0 %v2301
    %2582 = vmatpush.bf16.msra.mxu0 %v2297
    %2583 = vmatpush.bf16.msra.mxu0 %v2293
    %2584 = vmatpush.bf16.msra.mxu0 %v2289
    %2585 = vmatmul.bf16.gmra.mxu0 %v1860
    %v2586 = vpop.f32.mrf.mxu0
    %v2587 = vadd.f32 %v2574, %v2586
    %v2588 = vpop.f32.mrf.mxu0
    %2589 = vdwg.mxu0
    %2590 = vmatpush.bf16.msra.mxu0 %v2349
    %2591 = vmatpush.bf16.msra.mxu0 %v2345
    %2592 = vmatpush.bf16.msra.mxu0 %v2341
    %2593 = vmatpush.bf16.msra.mxu0 %v2337
    %2594 = vmatpush.bf16.msra.mxu0 %v2333
    %2595 = vmatpush.bf16.msra.mxu0 %v2329
    %2596 = vmatpush.bf16.msra.mxu0 %v2325
    %2597 = vmatpush.bf16.msra.mxu0 %v2321
    %2598 = vmatmul.bf16.gmra.mxu0 %v1861
    %v2599 = vpop.f32.mrf.mxu0
    %v2600 = vadd.f32 %v2587, %v2599
    %v2601 = vpop.f32.mrf.mxu0
    %2602 = vdwg.mxu0
    %2603 = vmatpush.bf16.msra.mxu0 %v2381
    %2604 = vmatpush.bf16.msra.mxu0 %v2377
    %2605 = vmatpush.bf16.msra.mxu0 %v2373
    %2606 = vmatpush.bf16.msra.mxu0 %v2369
    %2607 = vmatpush.bf16.msra.mxu0 %v2365
    %2608 = vmatpush.bf16.msra.mxu0 %v2361
    %2609 = vmatpush.bf16.msra.mxu0 %v2357
    %2610 = vmatpush.bf16.msra.mxu0 %v2353
    %2611 = vmatmul.bf16.gmra.mxu0 %v1862
    %v2612 = vpop.f32.mrf.mxu0
    %v2613 = vadd.f32 %v2600, %v2612
    %v2614 = vpop.f32.mrf.mxu0
    %2615 = vdwg.mxu0
    %2616 = vmatpush.bf16.msra.mxu0 %v2286
    %2617 = vmatpush.bf16.msra.mxu0 %v2282
    %2618 = vmatpush.bf16.msra.mxu0 %v2278
    %2619 = vmatpush.bf16.msra.mxu0 %v2274
    %2620 = vmatpush.bf16.msra.mxu0 %v2270
    %2621 = vmatpush.bf16.msra.mxu0 %v2266
    %2622 = vmatpush.bf16.msra.mxu0 %v2262
    %2623 = vmatpush.bf16.msra.mxu0 %v2258
    %2624 = vmatmul.bf16.gmra.mxu0 %v1859
    %v2625 = vpop.f32.mrf.mxu0
    %v2626 = vadd.f32 %v1866, %v2625
    %v2627 = vpop.f32.mrf.mxu0
    %2628 = vdwg.mxu0
    %2629 = vmatpush.bf16.msra.mxu0 %v2318
    %2630 = vmatpush.bf16.msra.mxu0 %v2314
    %2631 = vmatpush.bf16.msra.mxu0 %v2310
    %2632 = vmatpush.bf16.msra.mxu0 %v2306
    %2633 = vmatpush.bf16.msra.mxu0 %v2302
    %2634 = vmatpush.bf16.msra.mxu0 %v2298
    %2635 = vmatpush.bf16.msra.mxu0 %v2294
    %2636 = vmatpush.bf16.msra.mxu0 %v2290
    %2637 = vmatmul.bf16.gmra.mxu0 %v1860
    %v2638 = vpop.f32.mrf.mxu0
    %v2639 = vadd.f32 %v2626, %v2638
    %v2640 = vpop.f32.mrf.mxu0
    %2641 = vdwg.mxu0
    %2642 = vmatpush.bf16.msra.mxu0 %v2350
    %2643 = vmatpush.bf16.msra.mxu0 %v2346
    %2644 = vmatpush.bf16.msra.mxu0 %v2342
    %2645 = vmatpush.bf16.msra.mxu0 %v2338
    %2646 = vmatpush.bf16.msra.mxu0 %v2334
    %2647 = vmatpush.bf16.msra.mxu0 %v2330
    %2648 = vmatpush.bf16.msra.mxu0 %v2326
    %2649 = vmatpush.bf16.msra.mxu0 %v2322
    %2650 = vmatmul.bf16.gmra.mxu0 %v1861
    %v2651 = vpop.f32.mrf.mxu0
    %v2652 = vadd.f32 %v2639, %v2651
    %v2653 = vpop.f32.mrf.mxu0
    %2654 = vdwg.mxu0
    %2655 = vmatpush.bf16.msra.mxu0 %v2382
    %2656 = vmatpush.bf16.msra.mxu0 %v2378
    %2657 = vmatpush.bf16.msra.mxu0 %v2374
    %2658 = vmatpush.bf16.msra.mxu0 %v2370
    %2659 = vmatpush.bf16.msra.mxu0 %v2366
    %2660 = vmatpush.bf16.msra.mxu0 %v2362
    %2661 = vmatpush.bf16.msra.mxu0 %v2358
    %2662 = vmatpush.bf16.msra.mxu0 %v2354
    %2663 = vmatmul.bf16.gmra.mxu0 %v1862
    %v2664 = vpop.f32.mrf.mxu0
    %v2665 = vadd.f32 %v2652, %v2664
    %v2666 = vpop.f32.mrf.mxu0
    %2667 = vdwg.mxu0
    %2668 = vmatpush.bf16.msra.mxu0 %v2287
    %2669 = vmatpush.bf16.msra.mxu0 %v2283
    %2670 = vmatpush.bf16.msra.mxu0 %v2279
    %2671 = vmatpush.bf16.msra.mxu0 %v2275
    %2672 = vmatpush.bf16.msra.mxu0 %v2271
    %2673 = vmatpush.bf16.msra.mxu0 %v2267
    %2674 = vmatpush.bf16.msra.mxu0 %v2263
    %2675 = vmatpush.bf16.msra.mxu0 %v2259
    %2676 = vmatmul.bf16.gmra.mxu0 %v1859
    %v2677 = vpop.f32.mrf.mxu0
    %v2678 = vadd.f32 %v1867, %v2677
    %v2679 = vpop.f32.mrf.mxu0
    %2680 = vdwg.mxu0
    %2681 = vmatpush.bf16.msra.mxu0 %v2319
    %2682 = vmatpush.bf16.msra.mxu0 %v2315
    %2683 = vmatpush.bf16.msra.mxu0 %v2311
    %2684 = vmatpush.bf16.msra.mxu0 %v2307
    %2685 = vmatpush.bf16.msra.mxu0 %v2303
    %2686 = vmatpush.bf16.msra.mxu0 %v2299
    %2687 = vmatpush.bf16.msra.mxu0 %v2295
    %2688 = vmatpush.bf16.msra.mxu0 %v2291
    %2689 = vmatmul.bf16.gmra.mxu0 %v1860
    %v2690 = vpop.f32.mrf.mxu0
    %v2691 = vadd.f32 %v2678, %v2690
    %v2692 = vpop.f32.mrf.mxu0
    %2693 = vdwg.mxu0
    %2694 = vmatpush.bf16.msra.mxu0 %v2351
    %2695 = vmatpush.bf16.msra.mxu0 %v2347
    %2696 = vmatpush.bf16.msra.mxu0 %v2343
    %2697 = vmatpush.bf16.msra.mxu0 %v2339
    %2698 = vmatpush.bf16.msra.mxu0 %v2335
    %2699 = vmatpush.bf16.msra.mxu0 %v2331
    %2700 = vmatpush.bf16.msra.mxu0 %v2327
    %2701 = vmatpush.bf16.msra.mxu0 %v2323
    %2702 = vmatmul.bf16.gmra.mxu0 %v1861
    %v2703 = vpop.f32.mrf.mxu0
    %v2704 = vadd.f32 %v2691, %v2703
    %v2705 = vpop.f32.mrf.mxu0
    %2706 = vdwg.mxu0
    %2707 = vmatpush.bf16.msra.mxu0 %v2383
    %2708 = vmatpush.bf16.msra.mxu0 %v2379
    %2709 = vmatpush.bf16.msra.mxu0 %v2375
    %2710 = vmatpush.bf16.msra.mxu0 %v2371
    %2711 = vmatpush.bf16.msra.mxu0 %v2367
    %2712 = vmatpush.bf16.msra.mxu0 %v2363
    %2713 = vmatpush.bf16.msra.mxu0 %v2359
    %2714 = vmatpush.bf16.msra.mxu0 %v2355
    %2715 = vmatmul.bf16.gmra.mxu0 %v1862
    %v2716 = vpop.f32.mrf.mxu0
    %v2717 = vadd.f32 %v2704, %v2716
    %v2718 = vpop.f32.mrf.mxu0
    %2719 = vdwg.mxu0
    %v2720 = vmax.f32 %v2561, 0.0
    %v2721 = vmax.f32 %v2613, 0.0
    %v2722 = vmax.f32 %v2665, 0.0
    %v2723 = vmax.f32 %v2717, 0.0
    %v2725 = vperm.slane %v479, 0
    %v2726 = vperm.slane %v479, 1
    %v2727 = vperm.slane %v479, 2
    %v2728 = vperm.slane %v479, 3
    %v2733 = vmul.f32 %v2720, %v2725
    %v2734 = vmul.f32 %v2721, %v2726
    %v2735 = vmul.f32 %v2722, %v2727
    %v2736 = vmul.f32 %v2723, %v2728
    %v2738 = vperm.slane %v481, 0
    %v2739 = vperm.slane %v481, 1
    %v2740 = vperm.slane %v481, 2
    %v2741 = vperm.slane %v481, 3
    %v2746 = vadd.f32 %v2733, %v2738
    %v2747 = vadd.f32 %v2734, %v2739
    %v2748 = vadd.f32 %v2735, %v2740
    %v2749 = vadd.f32 %v2736, %v2741
    %v2750 = vpack.c.bf16 %v2746, %v2746
    %v2751 = vpack.c.bf16 %v2747, %v2747
    %v2752 = vpack.c.bf16 %v2748, %v2748
    %v2753 = vpack.c.bf16 %v2749, %v2749
    %v2755 = vperm.slane %v483, 0
    %v2756 = vperm.slane %v483, 1
    %v2823 = vunpack.c.l.b16 %v403
    %v2824 = vunpack.c.h.b16 %v403
    %v2825 = vunpack.c.l.b16 %v404
    %v2826 = vunpack.c.h.b16 %v404
    %v2827 = vunpack.c.l.b16 %v405
    %v2828 = vunpack.c.h.b16 %v405
    %v2829 = vunpack.c.l.b16 %v406
    %v2830 = vunpack.c.h.b16 %v406
    %v2831 = vunpack.c.l.b16 %v407
    %v2832 = vunpack.c.h.b16 %v407
    %v2833 = vunpack.c.l.b16 %v408
    %v2834 = vunpack.c.h.b16 %v408
    %v2835 = vunpack.c.l.b16 %v409
    %v2836 = vunpack.c.h.b16 %v409
    %v2837 = vunpack.c.l.b16 %v410
    %v2838 = vunpack.c.h.b16 %v410
    %v2839 = vunpack.c.l.b16 %v411
    %v2840 = vunpack.c.h.b16 %v411
    %v2841 = vunpack.c.l.b16 %v412
    %v2842 = vunpack.c.h.b16 %v412
    %v2843 = vunpack.c.l.b16 %v413
    %v2844 = vunpack.c.h.b16 %v413
    %v2845 = vunpack.c.l.b16 %v414
    %v2846 = vunpack.c.h.b16 %v414
    %v2847 = vunpack.c.l.b16 %v415
    %v2848 = vunpack.c.h.b16 %v415
    %v2849 = vunpack.c.l.b16 %v416
    %v2850 = vunpack.c.h.b16 %v416
    %v2851 = vunpack.c.l.b16 %v417
    %v2852 = vunpack.c.h.b16 %v417
    %v2853 = vunpack.c.l.b16 %v418
    %v2854 = vunpack.c.h.b16 %v418
    %v2855 = vunpack.c.l.b16 %v419
    %v2856 = vunpack.c.h.b16 %v419
    %v2857 = vunpack.c.l.b16 %v420
    %v2858 = vunpack.c.h.b16 %v420
    %v2859 = vunpack.c.l.b16 %v421
    %v2860 = vunpack.c.h.b16 %v421
    %v2861 = vunpack.c.l.b16 %v422
    %v2862 = vunpack.c.h.b16 %v422
    %v2863 = vunpack.c.l.b16 %v423
    %v2864 = vunpack.c.h.b16 %v423
    %v2865 = vunpack.c.l.b16 %v424
    %v2866 = vunpack.c.h.b16 %v424
    %v2867 = vunpack.c.l.b16 %v425
    %v2868 = vunpack.c.h.b16 %v425
    %v2869 = vunpack.c.l.b16 %v426
    %v2870 = vunpack.c.h.b16 %v426
    %v2871 = vunpack.c.l.b16 %v427
    %v2872 = vunpack.c.h.b16 %v427
    %v2873 = vunpack.c.l.b16 %v428
    %v2874 = vunpack.c.h.b16 %v428
    %v2875 = vunpack.c.l.b16 %v429
    %v2876 = vunpack.c.h.b16 %v429
    %v2877 = vunpack.c.l.b16 %v430
    %v2878 = vunpack.c.h.b16 %v430
    %v2879 = vunpack.c.l.b16 %v431
    %v2880 = vunpack.c.h.b16 %v431
    %v2881 = vunpack.c.l.b16 %v432
    %v2882 = vunpack.c.h.b16 %v432
    %v2883 = vunpack.c.l.b16 %v433
    %v2884 = vunpack.c.h.b16 %v433
    %v2885 = vunpack.c.l.b16 %v434
    %v2886 = vunpack.c.h.b16 %v434
    %v2887 = vunpack.c.l.b16 %v435
    %v2888 = vunpack.c.h.b16 %v435
    %v2889 = vunpack.c.l.b16 %v436
    %v2890 = vunpack.c.h.b16 %v436
    %v2891 = vunpack.c.l.b16 %v437
    %v2892 = vunpack.c.h.b16 %v437
    %v2893 = vunpack.c.l.b16 %v438
    %v2894 = vunpack.c.h.b16 %v438
    %v2895 = vunpack.c.l.b16 %v439
    %v2896 = vunpack.c.h.b16 %v439
    %v2897 = vunpack.c.l.b16 %v440
    %v2898 = vunpack.c.h.b16 %v440
    %v2899 = vunpack.c.l.b16 %v441
    %v2900 = vunpack.c.h.b16 %v441
    %v2901 = vunpack.c.l.b16 %v442
    %v2902 = vunpack.c.h.b16 %v442
    %v2903 = vunpack.c.l.b16 %v443
    %v2904 = vunpack.c.h.b16 %v443
    %v2905 = vunpack.c.l.b16 %v444
    %v2906 = vunpack.c.h.b16 %v444
    %v2907 = vunpack.c.l.b16 %v445
    %v2908 = vunpack.c.h.b16 %v445
    %v2909 = vunpack.c.l.b16 %v446
    %v2910 = vunpack.c.h.b16 %v446
    %v2911 = vunpack.c.l.b16 %v447
    %v2912 = vunpack.c.h.b16 %v447
    %v2913 = vunpack.c.l.b16 %v448
    %v2914 = vunpack.c.h.b16 %v448
    %v2915 = vunpack.c.l.b16 %v449
    %v2916 = vunpack.c.h.b16 %v449
    %v2917 = vunpack.c.l.b16 %v450
    %v2918 = vunpack.c.h.b16 %v450
    %v2919 = vunpack.c.l.b16 %v451
    %v2920 = vunpack.c.h.b16 %v451
    %v2921 = vunpack.c.l.b16 %v452
    %v2922 = vunpack.c.h.b16 %v452
    %v2923 = vunpack.c.l.b16 %v453
    %v2924 = vunpack.c.h.b16 %v453
    %v2925 = vunpack.c.l.b16 %v454
    %v2926 = vunpack.c.h.b16 %v454
    %v2927 = vunpack.c.l.b16 %v455
    %v2928 = vunpack.c.h.b16 %v455
    %v2929 = vunpack.c.l.b16 %v456
    %v2930 = vunpack.c.h.b16 %v456
    %v2931 = vunpack.c.l.b16 %v457
    %v2932 = vunpack.c.h.b16 %v457
    %v2933 = vunpack.c.l.b16 %v458
    %v2934 = vunpack.c.h.b16 %v458
    %v2935 = vunpack.c.l.b16 %v459
    %v2936 = vunpack.c.h.b16 %v459
    %v2937 = vunpack.c.l.b16 %v460
    %v2938 = vunpack.c.h.b16 %v460
    %v2939 = vunpack.c.l.b16 %v461
    %v2940 = vunpack.c.h.b16 %v461
    %v2941 = vunpack.c.l.b16 %v462
    %v2942 = vunpack.c.h.b16 %v462
    %v2943 = vunpack.c.l.b16 %v463
    %v2944 = vunpack.c.h.b16 %v463
    %v2945 = vunpack.c.l.b16 %v464
    %v2946 = vunpack.c.h.b16 %v464
    %v2947 = vunpack.c.l.b16 %v465
    %v2948 = vunpack.c.h.b16 %v465
    %v2949 = vunpack.c.l.b16 %v466
    %v2950 = vunpack.c.h.b16 %v466
    %v2951 = vpack.c.b16 %v2825, %v2823
    %v2952 = vpack.c.b16 %v2826, %v2824
    %v2953 = vpack.c.b16 %v2829, %v2827
    %v2954 = vpack.c.b16 %v2830, %v2828
    %v2955 = vpack.c.b16 %v2833, %v2831
    %v2956 = vpack.c.b16 %v2834, %v2832
    %v2957 = vpack.c.b16 %v2837, %v2835
    %v2958 = vpack.c.b16 %v2838, %v2836
    %v2959 = vpack.c.b16 %v2841, %v2839
    %v2960 = vpack.c.b16 %v2842, %v2840
    %v2961 = vpack.c.b16 %v2845, %v2843
    %v2962 = vpack.c.b16 %v2846, %v2844
    %v2963 = vpack.c.b16 %v2849, %v2847
    %v2964 = vpack.c.b16 %v2850, %v2848
    %v2965 = vpack.c.b16 %v2853, %v2851
    %v2966 = vpack.c.b16 %v2854, %v2852
    %v2967 = vpack.c.b16 %v2857, %v2855
    %v2968 = vpack.c.b16 %v2858, %v2856
    %v2969 = vpack.c.b16 %v2861, %v2859
    %v2970 = vpack.c.b16 %v2862, %v2860
    %v2971 = vpack.c.b16 %v2865, %v2863
    %v2972 = vpack.c.b16 %v2866, %v2864
    %v2973 = vpack.c.b16 %v2869, %v2867
    %v2974 = vpack.c.b16 %v2870, %v2868
    %v2975 = vpack.c.b16 %v2873, %v2871
    %v2976 = vpack.c.b16 %v2874, %v2872
    %v2977 = vpack.c.b16 %v2877, %v2875
    %v2978 = vpack.c.b16 %v2878, %v2876
    %v2979 = vpack.c.b16 %v2881, %v2879
    %v2980 = vpack.c.b16 %v2882, %v2880
    %v2981 = vpack.c.b16 %v2885, %v2883
    %v2982 = vpack.c.b16 %v2886, %v2884
    %v2983 = vpack.c.b16 %v2889, %v2887
    %v2984 = vpack.c.b16 %v2890, %v2888
    %v2985 = vpack.c.b16 %v2893, %v2891
    %v2986 = vpack.c.b16 %v2894, %v2892
    %v2987 = vpack.c.b16 %v2897, %v2895
    %v2988 = vpack.c.b16 %v2898, %v2896
    %v2989 = vpack.c.b16 %v2901, %v2899
    %v2990 = vpack.c.b16 %v2902, %v2900
    %v2991 = vpack.c.b16 %v2905, %v2903
    %v2992 = vpack.c.b16 %v2906, %v2904
    %v2993 = vpack.c.b16 %v2909, %v2907
    %v2994 = vpack.c.b16 %v2910, %v2908
    %v2995 = vpack.c.b16 %v2913, %v2911
    %v2996 = vpack.c.b16 %v2914, %v2912
    %v2997 = vpack.c.b16 %v2917, %v2915
    %v2998 = vpack.c.b16 %v2918, %v2916
    %v2999 = vpack.c.b16 %v2921, %v2919
    %v3000 = vpack.c.b16 %v2922, %v2920
    %v3001 = vpack.c.b16 %v2925, %v2923
    %v3002 = vpack.c.b16 %v2926, %v2924
    %v3003 = vpack.c.b16 %v2929, %v2927
    %v3004 = vpack.c.b16 %v2930, %v2928
    %v3005 = vpack.c.b16 %v2933, %v2931
    %v3006 = vpack.c.b16 %v2934, %v2932
    %v3007 = vpack.c.b16 %v2937, %v2935
    %v3008 = vpack.c.b16 %v2938, %v2936
    %v3009 = vpack.c.b16 %v2941, %v2939
    %v3010 = vpack.c.b16 %v2942, %v2940
    %v3011 = vpack.c.b16 %v2945, %v2943
    %v3012 = vpack.c.b16 %v2946, %v2944
    %v3013 = vpack.c.b16 %v2949, %v2947
    %v3014 = vpack.c.b16 %v2950, %v2948
    %3079 = vmatpush.bf16.msra.mxu0 %v2965
    %3080 = vmatpush.bf16.msra.mxu0 %v2963
    %3081 = vmatpush.bf16.msra.mxu0 %v2961
    %3082 = vmatpush.bf16.msra.mxu0 %v2959
    %3083 = vmatpush.bf16.msra.mxu0 %v2957
    %3084 = vmatpush.bf16.msra.mxu0 %v2955
    %3085 = vmatpush.bf16.msra.mxu0 %v2953
    %3086 = vmatpush.bf16.msra.mxu0 %v2951
    %3087 = vmatmul.bf16.gmra.mxu0 %v2750
    %v3088 = vpop.f32.mrf.mxu0
    %v3089 = vadd.f32 %v2755, %v3088
    %v3090 = vpop.f32.mrf.mxu0
    %3091 = vdwg.mxu0
    %3092 = vmatpush.bf16.msra.mxu0 %v2981
    %3093 = vmatpush.bf16.msra.mxu0 %v2979
    %3094 = vmatpush.bf16.msra.mxu0 %v2977
    %3095 = vmatpush.bf16.msra.mxu0 %v2975
    %3096 = vmatpush.bf16.msra.mxu0 %v2973
    %3097 = vmatpush.bf16.msra.mxu0 %v2971
    %3098 = vmatpush.bf16.msra.mxu0 %v2969
    %3099 = vmatpush.bf16.msra.mxu0 %v2967
    %3100 = vmatmul.bf16.gmra.mxu0 %v2751
    %v3101 = vpop.f32.mrf.mxu0
    %v3102 = vadd.f32 %v3089, %v3101
    %v3103 = vpop.f32.mrf.mxu0
    %3104 = vdwg.mxu0
    %3105 = vmatpush.bf16.msra.mxu0 %v2997
    %3106 = vmatpush.bf16.msra.mxu0 %v2995
    %3107 = vmatpush.bf16.msra.mxu0 %v2993
    %3108 = vmatpush.bf16.msra.mxu0 %v2991
    %3109 = vmatpush.bf16.msra.mxu0 %v2989
    %3110 = vmatpush.bf16.msra.mxu0 %v2987
    %3111 = vmatpush.bf16.msra.mxu0 %v2985
    %3112 = vmatpush.bf16.msra.mxu0 %v2983
    %3113 = vmatmul.bf16.gmra.mxu0 %v2752
    %v3114 = vpop.f32.mrf.mxu0
    %v3115 = vadd.f32 %v3102, %v3114
    %v3116 = vpop.f32.mrf.mxu0
    %3117 = vdwg.mxu0
    %3118 = vmatpush.bf16.msra.mxu0 %v3013
    %3119 = vmatpush.bf16.msra.mxu0 %v3011
    %3120 = vmatpush.bf16.msra.mxu0 %v3009
    %3121 = vmatpush.bf16.msra.mxu0 %v3007
    %3122 = vmatpush.bf16.msra.mxu0 %v3005
    %3123 = vmatpush.bf16.msra.mxu0 %v3003
    %3124 = vmatpush.bf16.msra.mxu0 %v3001
    %3125 = vmatpush.bf16.msra.mxu0 %v2999
    %3126 = vmatmul.bf16.gmra.mxu0 %v2753
    %v3127 = vpop.f32.mrf.mxu0
    %v3128 = vadd.f32 %v3115, %v3127
    %v3129 = vpop.f32.mrf.mxu0
    %3130 = vdwg.mxu0
    %3131 = vmatpush.bf16.msra.mxu0 %v2966
    %3132 = vmatpush.bf16.msra.mxu0 %v2964
    %3133 = vmatpush.bf16.msra.mxu0 %v2962
    %3134 = vmatpush.bf16.msra.mxu0 %v2960
    %3135 = vmatpush.bf16.msra.mxu0 %v2958
    %3136 = vmatpush.bf16.msra.mxu0 %v2956
    %3137 = vmatpush.bf16.msra.mxu0 %v2954
    %3138 = vmatpush.bf16.msra.mxu0 %v2952
    %3139 = vmatmul.bf16.gmra.mxu0 %v2750
    %v3140 = vpop.f32.mrf.mxu0
    %v3141 = vadd.f32 %v2756, %v3140
    %v3142 = vpop.f32.mrf.mxu0
    %3143 = vdwg.mxu0
    %3144 = vmatpush.bf16.msra.mxu0 %v2982
    %3145 = vmatpush.bf16.msra.mxu0 %v2980
    %3146 = vmatpush.bf16.msra.mxu0 %v2978
    %3147 = vmatpush.bf16.msra.mxu0 %v2976
    %3148 = vmatpush.bf16.msra.mxu0 %v2974
    %3149 = vmatpush.bf16.msra.mxu0 %v2972
    %3150 = vmatpush.bf16.msra.mxu0 %v2970
    %3151 = vmatpush.bf16.msra.mxu0 %v2968
    %3152 = vmatmul.bf16.gmra.mxu0 %v2751
    %v3153 = vpop.f32.mrf.mxu0
    %v3154 = vadd.f32 %v3141, %v3153
    %v3155 = vpop.f32.mrf.mxu0
    %3156 = vdwg.mxu0
    %3157 = vmatpush.bf16.msra.mxu0 %v2998
    %3158 = vmatpush.bf16.msra.mxu0 %v2996
    %3159 = vmatpush.bf16.msra.mxu0 %v2994
    %3160 = vmatpush.bf16.msra.mxu0 %v2992
    %3161 = vmatpush.bf16.msra.mxu0 %v2990
    %3162 = vmatpush.bf16.msra.mxu0 %v2988
    %3163 = vmatpush.bf16.msra.mxu0 %v2986
    %3164 = vmatpush.bf16.msra.mxu0 %v2984
    %3165 = vmatmul.bf16.gmra.mxu0 %v2752
    %v3166 = vpop.f32.mrf.mxu0
    %v3167 = vadd.f32 %v3154, %v3166
    %v3168 = vpop.f32.mrf.mxu0
    %3169 = vdwg.mxu0
    %3170 = vmatpush.bf16.msra.mxu0 %v3014
    %3171 = vmatpush.bf16.msra.mxu0 %v3012
    %3172 = vmatpush.bf16.msra.mxu0 %v3010
    %3173 = vmatpush.bf16.msra.mxu0 %v3008
    %3174 = vmatpush.bf16.msra.mxu0 %v3006
    %3175 = vmatpush.bf16.msra.mxu0 %v3004
    %3176 = vmatpush.bf16.msra.mxu0 %v3002
    %3177 = vmatpush.bf16.msra.mxu0 %v3000
    %3178 = vmatmul.bf16.gmra.mxu0 %v2753
    %v3179 = vpop.f32.mrf.mxu0
    %v3180 = vadd.f32 %v3167, %v3179
    %v3181 = vpop.f32.mrf.mxu0
    %3182 = vdwg.mxu0
    %3183 = vst [vmem:[#allocation10] sm:$0xff] %v3128
    %3184 = vst [vmem:[#allocation10 + $0x8] sm:$0xff] %v3180
    // Predicated region
    $region34: #{three_layers_forward.1} parent=1 // pred_check
      _
    $region35: #{three_layers_forward.1} parent=1 // pred_check_branch
      %3186 = sbr.rel (0) target = $region37
    $region36: #{three_layers_forward.1} parent=1 // pred_region
      %3188 = vsyncadd [#allocation4], 0
      %s3190 = sshll.u32 [#allocation10], 4
      %s3191 = int_to_ptr.vmem [resolvable:$true] %s3190
      %s3192 = sshll.u32 %s4, 4
      %s3193 = int_to_ptr.hbm [resolvable:$true] %s3192
      %3195 = dma.vmem_to_hbm [thread:$0]  %s3191, 256, %s3193, [#allocation4]
    $region37: #{three_layers_forward.1} parent=1 // pred_fallthru
      _
    // Predicated region
    $region38: #{three_layers_forward.1} parent=1 // pred_check
      _
    $region39: #{three_layers_forward.1} parent=1 // pred_check_branch
      %3197 = sbr.rel (0) target = $region41
    $region40: #{three_layers_forward.1} parent=1 // pred_region
      %3199 = dma.done [#allocation4], 256
    $region41: #{three_layers_forward.1} parent=1 // pred_fallthru
      _
    %3200 = vsyncpa [#allocation3], 1
    %3201 = vsyncpa [#allocation6], 1
    %3202 = vsyncpa [#allocation9], 1
    %3203 = vsyncpa [#allocation4], 1

</llo_original>
